<compile_context>
chip_gen: v7x
topology: tpu7x:2x2x1
jax: 0.10.0
libtpu: 0.0.40
codegen_flags: <defaults>
</compile_context>

<pallas_src>
import math

import jax
import jax.numpy as jnp
from jax import lax
from jax.experimental import pallas as pl

# ----- small, self-consistent config -----
BATCH = 2
SEQ = 8
N_EMBD = 32
N_HEAD = 4
HEAD_DIM = N_EMBD // N_HEAD
MLP_HIDDEN = 4 * N_EMBD          # mlp_expansion_factor = 4
LN_EPS = 1e-5                    # torch.nn.LayerNorm default
NEG_INF = -1e30                  # finite: exact zeros after exp, no NaNs


def _layernorm(x32, gamma, beta):
    """PyTorch LayerNorm semantics over the last axis (biased variance)."""
    mean = jnp.mean(x32, axis=-1, keepdims=True)
    var = jnp.mean((x32 - mean) ** 2, axis=-1, keepdims=True)
    return (x32 - mean) * lax.rsqrt(var + LN_EPS) * gamma + beta


# ------------------ fused transformer-block kernel (single invocation) ------
# x_ref is the batch-flattened activation (B*T, C); bias_ref is the
# block-diagonal causal additive bias (B*T, B*T) built in the wrapper.
def block_kernel(x_ref, bias_ref, g1_ref, b1_ref, wqkv_ref, bqkv_ref,
                 wproj_ref, bproj_ref, g2_ref, b2_ref,
                 wfc1_ref, bfc1_ref, wfc2_ref, bfc2_ref, o_ref):
    x = x_ref[...].astype(jnp.float32)                      # (M, C), M = B*T

    # ---------- attention sub-block ----------
    h = _layernorm(x, g1_ref[...], b1_ref[...])             # (M, C)
    qkv = jnp.dot(h, wqkv_ref[...],
                  preferred_element_type=jnp.float32) + bqkv_ref[...]  # (M, 3C)
    q = qkv[:, :N_EMBD]
    k = qkv[:, N_EMBD:2 * N_EMBD]
    v = qkv[:, 2 * N_EMBD:]

    bias = bias_ref[...]                                    # (M, M) additive
    scale = 1.0 / math.sqrt(HEAD_DIM)

    # Static per-head loop; head outputs stay in vregs and are joined with a
    # lane concatenate (no VMEM slab, no masked partial stores).
    head_outs = []
    for hd in range(N_HEAD):
        lo = hd * HEAD_DIM
        qh = q[:, lo:lo + HEAD_DIM]                         # (M, D)
        kh = k[:, lo:lo + HEAD_DIM]
        vh = v[:, lo:lo + HEAD_DIM]
        # contract trailing dims of both operands (no explicit kh.T relayout)
        s = lax.dot_general(qh, kh, (((1,), (1,)), ((), ())),
                            preferred_element_type=jnp.float32) * scale
        s = s + bias                                        # causal + batch-block
        s = s - jnp.max(s, axis=-1, keepdims=True)
        p = jnp.exp(s)
        p = p * pl.reciprocal(jnp.sum(p, axis=-1, keepdims=True), approx=False)
        head_outs.append(jnp.dot(p, vh, preferred_element_type=jnp.float32))
    attn_out = jnp.concatenate(head_outs, axis=-1)          # (M, C) in vregs

    proj = jnp.dot(attn_out, wproj_ref[...],
                   preferred_element_type=jnp.float32) + bproj_ref[...]
    x = x + proj                                            # residual 1

    # ---------- MLP sub-block (dropout p=0.0 -> identity) ----------
    h = _layernorm(x, g2_ref[...], b2_ref[...])
    h1 = jnp.dot(h, wfc1_ref[...],
                 preferred_element_type=jnp.float32) + bfc1_ref[...]    # (M, H)
    h1 = h1 * jax.nn.sigmoid(h1)                            # Swish / SiLU (EUP)
    h2 = jnp.dot(h1, wfc2_ref[...],
                 preferred_element_type=jnp.float32) + bfc2_ref[...]    # (M, C)
    o_ref[...] = (x + h2).astype(o_ref.dtype)               # residual 2


def block_forward(x, params):
    B, T, C = x.shape
    H = MLP_HIDDEN
    M = B * T

    # Block-diagonal causal additive bias, precomputed once in the wrapper.
    r = jnp.arange(M)
    same_batch = (r[:, None] // T) == (r[None, :] // T)
    causal = (r[:, None] % T) >= (r[None, :] % T)
    bias = jnp.where(same_batch & causal, 0.0, NEG_INF).astype(jnp.float32)

    n_params = (4 * C) + C * 3 * C + 3 * C + C * C + C + C * H + H + H * C + C
    cost = pl.CostEstimate(
        flops=int(2 * M * C * (3 * C + C + 2 * H)
                  + 4 * N_HEAD * M * M * HEAD_DIM),
        transcendentals=int(N_HEAD * M * M + M * H + 4 * M),
        bytes_accessed=int(4 * (2 * M * C + M * M + n_params)),
    )

    # No grid: one kernel invocation, all operands whole-array resident in
    # VMEM (trivially small here).  TODO(synk): at production C (e.g. 768),
    # reintroduce a (B, T//tq) grid with flash-style attention, bf16 weights,
    # pipeline_mode=pl.Buffered(1) on constant-index weight specs and
    # pltpu.CompilerParams(vmem_limit_bytes=...) sized to weight residency.
    fused = pl.pallas_call(
        block_kernel,
        out_shape=jax.ShapeDtypeStruct((M, C), x.dtype),
        cost_estimate=cost,
    )
    y = fused(x.reshape(M, C), bias,
              params["ln1_g"], params["ln1_b"],
              params["w_qkv"], params["b_qkv"],
              params["w_proj"], params["b_proj"],
              params["ln2_g"], params["ln2_b"],
              params["w_fc1"], params["b_fc1"],
              params["w_fc2"], params["b_fc2"])
    return y.reshape(B, T, C)


# ------------------ pure-JAX reference (correctness check) ------------------
def block_ref(x, p):
    def ln(v, g, b):
        m = jnp.mean(v, -1, keepdims=True)
        var = jnp.mean((v - m) ** 2, -1, keepdims=True)
        return (v - m) * lax.rsqrt(var + LN_EPS) * g + b

    h = ln(x, p["ln1_g"], p["ln1_b"])
    qkv = h @ p["w_qkv"] + p["b_qkv"]
    q, k, v = jnp.split(qkv, 3, axis=-1)
    B, T, C = x.shape
    q = q.reshape(B, T, N_HEAD, HEAD_DIM).transpose(0, 2, 1, 3)
    k = k.reshape(B, T, N_HEAD, HEAD_DIM).transpose(0, 2, 1, 3)
    v = v.reshape(B, T, N_HEAD, HEAD_DIM).transpose(0, 2, 1, 3)
    s = jnp.einsum("bhqd,bhkd->bhqk", q, k) / math.sqrt(HEAD_DIM)
    mask = jnp.tril(jnp.ones((T, T), bool))
    s = jnp.where(mask, s, -jnp.inf)
    pmat = jax.nn.softmax(s, axis=-1)
    a = jnp.einsum("bhqk,bhkd->bhqd", pmat, v).transpose(0, 2, 1, 3).reshape(B, T, C)
    x = x + (a @ p["w_proj"] + p["b_proj"])

    h = ln(x, p["ln2_g"], p["ln2_b"])
    h1 = h @ p["w_fc1"] + p["b_fc1"]
    h1 = h1 * jax.nn.sigmoid(h1)
    return x + (h1 @ p["w_fc2"] + p["b_fc2"])


def make_params(key):
    std = 0.02
    ks = jax.random.split(key, 4)
    C, H = N_EMBD, MLP_HIDDEN
    return {
        "ln1_g": jnp.ones((1, C), jnp.float32),
        "ln1_b": jnp.zeros((1, C), jnp.float32),
        "ln2_g": jnp.ones((1, C), jnp.float32),
        "ln2_b": jnp.zeros((1, C), jnp.float32),
        "w_qkv": std * jax.random.normal(ks[0], (C, 3 * C), jnp.float32),
        "b_qkv": jnp.zeros((1, 3 * C), jnp.float32),
        "w_proj": std * jax.random.normal(ks[1], (C, C), jnp.float32),
        "b_proj": jnp.zeros((1, C), jnp.float32),
        "w_fc1": std * jax.random.normal(ks[2], (C, H), jnp.float32),
        "b_fc1": jnp.zeros((1, H), jnp.float32),
        "w_fc2": std * jax.random.normal(ks[3], (H, C), jnp.float32),
        "b_fc2": jnp.zeros((1, C), jnp.float32),
    }


if __name__ == "__main__":
    key = jax.random.PRNGKey(0)
    k_x, k_p = jax.random.split(key)
    x = jax.random.normal(k_x, (BATCH, SEQ, N_EMBD), jnp.float32)
    params = make_params(k_p)

    out = jax.block_until_ready(block_forward(x, params))
    ref = jax.block_until_ready(block_ref(x, params))

    assert out.shape == x.shape and out.dtype == x.dtype
    assert jnp.allclose(out, ref, atol=2e-4, rtol=2e-4), "mismatch vs reference"
    # TODO(synk): dropout is identity here (p=0.0 inference); no stochastic path.
    print("KERNEL_OK")
</pallas_src>

<mosaic_0001>
module attributes {stable_mosaic.version = 11 : i64} {
  func.func @block_kernel(%arg0: memref<16x32xf32, #tpu.memory_space<vmem>>, %arg1: memref<16x16xf32, #tpu.memory_space<vmem>>, %arg2: memref<1x32xf32, #tpu.memory_space<vmem>>, %arg3: memref<1x32xf32, #tpu.memory_space<vmem>>, %arg4: memref<32x96xf32, #tpu.memory_space<vmem>>, %arg5: memref<1x96xf32, #tpu.memory_space<vmem>>, %arg6: memref<32x32xf32, #tpu.memory_space<vmem>>, %arg7: memref<1x32xf32, #tpu.memory_space<vmem>>, %arg8: memref<1x32xf32, #tpu.memory_space<vmem>>, %arg9: memref<1x32xf32, #tpu.memory_space<vmem>>, %arg10: memref<32x128xf32, #tpu.memory_space<vmem>>, %arg11: memref<1x128xf32, #tpu.memory_space<vmem>>, %arg12: memref<128x32xf32, #tpu.memory_space<vmem>>, %arg13: memref<1x32xf32, #tpu.memory_space<vmem>>, %arg14: memref<16x32xf32, #tpu.memory_space<vmem>>) attributes {dimension_semantics = [], scalar_prefetch = 0 : i64, scratch_operands = 0 : i64, tpu.core_type = #tpu.core_type<tc>} {
    %c0 = arith.constant 0 : index
    %c0_0 = arith.constant 0 : index
    %0 = vector.load %arg0[%c0, %c0_0] : memref<16x32xf32, #tpu.memory_space<vmem>>, vector<16x32xf32>
    %c0_1 = arith.constant 0 : index
    %c0_2 = arith.constant 0 : index
    %1 = vector.load %arg2[%c0_1, %c0_2] : memref<1x32xf32, #tpu.memory_space<vmem>>, vector<1x32xf32>
    %c0_3 = arith.constant 0 : index
    %c0_4 = arith.constant 0 : index
    %2 = vector.load %arg3[%c0_3, %c0_4] : memref<1x32xf32, #tpu.memory_space<vmem>>, vector<1x32xf32>
    %cst = arith.constant dense<0.000000e+00> : vector<16xf32>
    %3 = vector.multi_reduction <add>, %0, %cst [1] : vector<16x32xf32> to vector<16xf32>
    %4 = vector.shape_cast %3 : vector<16xf32> to vector<16x1xf32>
    %cst_5 = arith.constant 3.200000e+01 : f32
    %5 = vector.broadcast %cst_5 : f32 to vector<16x1xf32>
    %6 = arith.divf %4, %5 : vector<16x1xf32>
    %7 = vector.broadcast %6 : vector<16x1xf32> to vector<16x32xf32>
    %8 = arith.subf %0, %7 : vector<16x32xf32>
    %9 = arith.mulf %8, %8 : vector<16x32xf32>
    %cst_6 = arith.constant dense<0.000000e+00> : vector<16xf32>
    %10 = vector.multi_reduction <add>, %9, %cst_6 [1] : vector<16x32xf32> to vector<16xf32>
    %11 = vector.shape_cast %10 : vector<16xf32> to vector<16x1xf32>
    %cst_7 = arith.constant 3.200000e+01 : f32
    %12 = vector.broadcast %cst_7 : f32 to vector<16x1xf32>
    %13 = arith.divf %11, %12 : vector<16x1xf32>
    %14 = vector.broadcast %6 : vector<16x1xf32> to vector<16x32xf32>
    %15 = arith.subf %0, %14 : vector<16x32xf32>
    %cst_8 = arith.constant 9.99999974E-6 : f32
    %16 = vector.broadcast %cst_8 : f32 to vector<16x1xf32>
    %17 = arith.addf %13, %16 : vector<16x1xf32>
    %18 = math.rsqrt %17 : vector<16x1xf32>
    %19 = vector.broadcast %18 : vector<16x1xf32> to vector<16x32xf32>
    %20 = arith.mulf %15, %19 : vector<16x32xf32>
    %21 = vector.broadcast %1 : vector<1x32xf32> to vector<16x32xf32>
    %22 = arith.mulf %20, %21 : vector<16x32xf32>
    %23 = vector.broadcast %2 : vector<1x32xf32> to vector<16x32xf32>
    %24 = arith.addf %22, %23 : vector<16x32xf32>
    %c0_9 = arith.constant 0 : index
    %c0_10 = arith.constant 0 : index
    %25 = vector.load %arg4[%c0_9, %c0_10] : memref<32x96xf32, #tpu.memory_space<vmem>>, vector<32x96xf32>
    %cst_11 = arith.constant dense<0.000000e+00> : vector<16x96xf32>
    %26 = tpu.matmul %24, %25, %cst_11 {dimension_numbers = #tpu.dot_dimension_numbers<[1], [0], [0], [1], [0, 0, 1, 1], [], []>} : vector<16x32xf32>, vector<32x96xf32>, vector<16x96xf32> -> vector<16x96xf32>
    %c0_12 = arith.constant 0 : index
    %c0_13 = arith.constant 0 : index
    %27 = vector.load %arg5[%c0_12, %c0_13] : memref<1x96xf32, #tpu.memory_space<vmem>>, vector<1x96xf32>
    %28 = vector.broadcast %27 : vector<1x96xf32> to vector<16x96xf32>
    %29 = arith.addf %26, %28 : vector<16x96xf32>
    %30 = vector.extract_strided_slice %29 {offsets = [0, 0], sizes = [16, 32], strides = [1, 1]} : vector<16x96xf32> to vector<16x32xf32>
    %31 = vector.extract_strided_slice %29 {offsets = [0, 32], sizes = [16, 32], strides = [1, 1]} : vector<16x96xf32> to vector<16x32xf32>
    %32 = vector.extract_strided_slice %29 {offsets = [0, 64], sizes = [16, 32], strides = [1, 1]} : vector<16x96xf32> to vector<16x32xf32>
    %c0_14 = arith.constant 0 : index
    %c0_15 = arith.constant 0 : index
    %33 = vector.load %arg1[%c0_14, %c0_15] : memref<16x16xf32, #tpu.memory_space<vmem>>, vector<16x16xf32>
    %34 = vector.extract_strided_slice %30 {offsets = [0, 0], sizes = [16, 8], strides = [1, 1]} : vector<16x32xf32> to vector<16x8xf32>
    %35 = vector.extract_strided_slice %31 {offsets = [0, 0], sizes = [16, 8], strides = [1, 1]} : vector<16x32xf32> to vector<16x8xf32>
    %36 = vector.extract_strided_slice %32 {offsets = [0, 0], sizes = [16, 8], strides = [1, 1]} : vector<16x32xf32> to vector<16x8xf32>
    %cst_16 = arith.constant dense<0.000000e+00> : vector<16x16xf32>
    %37 = tpu.matmul %34, %35, %cst_16 {dimension_numbers = #tpu.dot_dimension_numbers<[1], [1], [0], [0], [0, 0, 1, 0], [], []>} : vector<16x8xf32>, vector<16x8xf32>, vector<16x16xf32> -> vector<16x16xf32>
    %cst_17 = arith.constant 0.353553385 : f32
    %38 = vector.broadcast %cst_17 : f32 to vector<16x16xf32>
    %39 = arith.mulf %37, %38 : vector<16x16xf32>
    %40 = arith.addf %39, %33 : vector<16x16xf32>
    %cst_18 = arith.constant dense<0xFF800000> : vector<16xf32>
    %41 = vector.multi_reduction <maximumf>, %40, %cst_18 [1] : vector<16x16xf32> to vector<16xf32>
    %42 = vector.shape_cast %41 : vector<16xf32> to vector<16x1xf32>
    %43 = vector.broadcast %42 : vector<16x1xf32> to vector<16x16xf32>
    %44 = arith.subf %40, %43 : vector<16x16xf32>
    %45 = math.exp %44 : vector<16x16xf32>
    %cst_19 = arith.constant dense<0.000000e+00> : vector<16xf32>
    %46 = vector.multi_reduction <add>, %45, %cst_19 [1] : vector<16x16xf32> to vector<16xf32>
    %47 = vector.shape_cast %46 : vector<16xf32> to vector<16x1xf32>
    %48 = tpu.reciprocal %47 : vector<16x1xf32> -> vector<16x1xf32>
    %49 = vector.broadcast %48 : vector<16x1xf32> to vector<16x16xf32>
    %50 = arith.mulf %45, %49 : vector<16x16xf32>
    %cst_20 = arith.constant dense<0.000000e+00> : vector<16x8xf32>
    %51 = tpu.matmul %50, %36, %cst_20 {dimension_numbers = #tpu.dot_dimension_numbers<[1], [0], [0], [1], [0, 0, 1, 1], [], []>} : vector<16x16xf32>, vector<16x8xf32>, vector<16x8xf32> -> vector<16x8xf32>
    %52 = vector.extract_strided_slice %30 {offsets = [0, 8], sizes = [16, 8], strides = [1, 1]} : vector<16x32xf32> to vector<16x8xf32>
    %53 = vector.extract_strided_slice %31 {offsets = [0, 8], sizes = [16, 8], strides = [1, 1]} : vector<16x32xf32> to vector<16x8xf32>
    %54 = vector.extract_strided_slice %32 {offsets = [0, 8], sizes = [16, 8], strides = [1, 1]} : vector<16x32xf32> to vector<16x8xf32>
    %cst_21 = arith.constant dense<0.000000e+00> : vector<16x16xf32>
    %55 = tpu.matmul %52, %53, %cst_21 {dimension_numbers = #tpu.dot_dimension_numbers<[1], [1], [0], [0], [0, 0, 1, 0], [], []>} : vector<16x8xf32>, vector<16x8xf32>, vector<16x16xf32> -> vector<16x16xf32>
    %cst_22 = arith.constant 0.353553385 : f32
    %56 = vector.broadcast %cst_22 : f32 to vector<16x16xf32>
    %57 = arith.mulf %55, %56 : vector<16x16xf32>
    %58 = arith.addf %57, %33 : vector<16x16xf32>
    %cst_23 = arith.constant dense<0xFF800000> : vector<16xf32>
    %59 = vector.multi_reduction <maximumf>, %58, %cst_23 [1] : vector<16x16xf32> to vector<16xf32>
    %60 = vector.shape_cast %59 : vector<16xf32> to vector<16x1xf32>
    %61 = vector.broadcast %60 : vector<16x1xf32> to vector<16x16xf32>
    %62 = arith.subf %58, %61 : vector<16x16xf32>
    %63 = math.exp %62 : vector<16x16xf32>
    %cst_24 = arith.constant dense<0.000000e+00> : vector<16xf32>
    %64 = vector.multi_reduction <add>, %63, %cst_24 [1] : vector<16x16xf32> to vector<16xf32>
    %65 = vector.shape_cast %64 : vector<16xf32> to vector<16x1xf32>
    %66 = tpu.reciprocal %65 : vector<16x1xf32> -> vector<16x1xf32>
    %67 = vector.broadcast %66 : vector<16x1xf32> to vector<16x16xf32>
    %68 = arith.mulf %63, %67 : vector<16x16xf32>
    %cst_25 = arith.constant dense<0.000000e+00> : vector<16x8xf32>
    %69 = tpu.matmul %68, %54, %cst_25 {dimension_numbers = #tpu.dot_dimension_numbers<[1], [0], [0], [1], [0, 0, 1, 1], [], []>} : vector<16x16xf32>, vector<16x8xf32>, vector<16x8xf32> -> vector<16x8xf32>
    %70 = vector.extract_strided_slice %30 {offsets = [0, 16], sizes = [16, 8], strides = [1, 1]} : vector<16x32xf32> to vector<16x8xf32>
    %71 = vector.extract_strided_slice %31 {offsets = [0, 16], sizes = [16, 8], strides = [1, 1]} : vector<16x32xf32> to vector<16x8xf32>
    %72 = vector.extract_strided_slice %32 {offsets = [0, 16], sizes = [16, 8], strides = [1, 1]} : vector<16x32xf32> to vector<16x8xf32>
    %cst_26 = arith.constant dense<0.000000e+00> : vector<16x16xf32>
    %73 = tpu.matmul %70, %71, %cst_26 {dimension_numbers = #tpu.dot_dimension_numbers<[1], [1], [0], [0], [0, 0, 1, 0], [], []>} : vector<16x8xf32>, vector<16x8xf32>, vector<16x16xf32> -> vector<16x16xf32>
    %cst_27 = arith.constant 0.353553385 : f32
    %74 = vector.broadcast %cst_27 : f32 to vector<16x16xf32>
    %75 = arith.mulf %73, %74 : vector<16x16xf32>
    %76 = arith.addf %75, %33 : vector<16x16xf32>
    %cst_28 = arith.constant dense<0xFF800000> : vector<16xf32>
    %77 = vector.multi_reduction <maximumf>, %76, %cst_28 [1] : vector<16x16xf32> to vector<16xf32>
    %78 = vector.shape_cast %77 : vector<16xf32> to vector<16x1xf32>
    %79 = vector.broadcast %78 : vector<16x1xf32> to vector<16x16xf32>
    %80 = arith.subf %76, %79 : vector<16x16xf32>
    %81 = math.exp %80 : vector<16x16xf32>
    %cst_29 = arith.constant dense<0.000000e+00> : vector<16xf32>
    %82 = vector.multi_reduction <add>, %81, %cst_29 [1] : vector<16x16xf32> to vector<16xf32>
    %83 = vector.shape_cast %82 : vector<16xf32> to vector<16x1xf32>
    %84 = tpu.reciprocal %83 : vector<16x1xf32> -> vector<16x1xf32>
    %85 = vector.broadcast %84 : vector<16x1xf32> to vector<16x16xf32>
    %86 = arith.mulf %81, %85 : vector<16x16xf32>
    %cst_30 = arith.constant dense<0.000000e+00> : vector<16x8xf32>
    %87 = tpu.matmul %86, %72, %cst_30 {dimension_numbers = #tpu.dot_dimension_numbers<[1], [0], [0], [1], [0, 0, 1, 1], [], []>} : vector<16x16xf32>, vector<16x8xf32>, vector<16x8xf32> -> vector<16x8xf32>
    %88 = vector.extract_strided_slice %30 {offsets = [0, 24], sizes = [16, 8], strides = [1, 1]} : vector<16x32xf32> to vector<16x8xf32>
    %89 = vector.extract_strided_slice %31 {offsets = [0, 24], sizes = [16, 8], strides = [1, 1]} : vector<16x32xf32> to vector<16x8xf32>
    %90 = vector.extract_strided_slice %32 {offsets = [0, 24], sizes = [16, 8], strides = [1, 1]} : vector<16x32xf32> to vector<16x8xf32>
    %cst_31 = arith.constant dense<0.000000e+00> : vector<16x16xf32>
    %91 = tpu.matmul %88, %89, %cst_31 {dimension_numbers = #tpu.dot_dimension_numbers<[1], [1], [0], [0], [0, 0, 1, 0], [], []>} : vector<16x8xf32>, vector<16x8xf32>, vector<16x16xf32> -> vector<16x16xf32>
    %cst_32 = arith.constant 0.353553385 : f32
    %92 = vector.broadcast %cst_32 : f32 to vector<16x16xf32>
    %93 = arith.mulf %91, %92 : vector<16x16xf32>
    %94 = arith.addf %93, %33 : vector<16x16xf32>
    %cst_33 = arith.constant dense<0xFF800000> : vector<16xf32>
    %95 = vector.multi_reduction <maximumf>, %94, %cst_33 [1] : vector<16x16xf32> to vector<16xf32>
    %96 = vector.shape_cast %95 : vector<16xf32> to vector<16x1xf32>
    %97 = vector.broadcast %96 : vector<16x1xf32> to vector<16x16xf32>
    %98 = arith.subf %94, %97 : vector<16x16xf32>
    %99 = math.exp %98 : vector<16x16xf32>
    %cst_34 = arith.constant dense<0.000000e+00> : vector<16xf32>
    %100 = vector.multi_reduction <add>, %99, %cst_34 [1] : vector<16x16xf32> to vector<16xf32>
    %101 = vector.shape_cast %100 : vector<16xf32> to vector<16x1xf32>
    %102 = tpu.reciprocal %101 : vector<16x1xf32> -> vector<16x1xf32>
    %103 = vector.broadcast %102 : vector<16x1xf32> to vector<16x16xf32>
    %104 = arith.mulf %99, %103 : vector<16x16xf32>
    %cst_35 = arith.constant dense<0.000000e+00> : vector<16x8xf32>
    %105 = tpu.matmul %104, %90, %cst_35 {dimension_numbers = #tpu.dot_dimension_numbers<[1], [0], [0], [1], [0, 0, 1, 1], [], []>} : vector<16x16xf32>, vector<16x8xf32>, vector<16x8xf32> -> vector<16x8xf32>
    %106 = tpu.concatenate %51, %69, %87, %105 in 1 : vector<16x8xf32>, vector<16x8xf32>, vector<16x8xf32>, vector<16x8xf32> -> vector<16x32xf32>
    %c0_36 = arith.constant 0 : index
    %c0_37 = arith.constant 0 : index
    %107 = vector.load %arg6[%c0_36, %c0_37] : memref<32x32xf32, #tpu.memory_space<vmem>>, vector<32x32xf32>
    %cst_38 = arith.constant dense<0.000000e+00> : vector<16x32xf32>
    %108 = tpu.matmul %106, %107, %cst_38 {dimension_numbers = #tpu.dot_dimension_numbers<[1], [0], [0], [1], [0, 0, 1, 1], [], []>} : vector<16x32xf32>, vector<32x32xf32>, vector<16x32xf32> -> vector<16x32xf32>
    %c0_39 = arith.constant 0 : index
    %c0_40 = arith.constant 0 : index
    %109 = vector.load %arg7[%c0_39, %c0_40] : memref<1x32xf32, #tpu.memory_space<vmem>>, vector<1x32xf32>
    %110 = vector.broadcast %109 : vector<1x32xf32> to vector<16x32xf32>
    %111 = arith.addf %108, %110 : vector<16x32xf32>
    %112 = arith.addf %0, %111 : vector<16x32xf32>
    %c0_41 = arith.constant 0 : index
    %c0_42 = arith.constant 0 : index
    %113 = vector.load %arg8[%c0_41, %c0_42] : memref<1x32xf32, #tpu.memory_space<vmem>>, vector<1x32xf32>
    %c0_43 = arith.constant 0 : index
    %c0_44 = arith.constant 0 : index
    %114 = vector.load %arg9[%c0_43, %c0_44] : memref<1x32xf32, #tpu.memory_space<vmem>>, vector<1x32xf32>
    %cst_45 = arith.constant dense<0.000000e+00> : vector<16xf32>
    %115 = vector.multi_reduction <add>, %112, %cst_45 [1] : vector<16x32xf32> to vector<16xf32>
    %116 = vector.shape_cast %115 : vector<16xf32> to vector<16x1xf32>
    %cst_46 = arith.constant 3.200000e+01 : f32
    %117 = vector.broadcast %cst_46 : f32 to vector<16x1xf32>
    %118 = arith.divf %116, %117 : vector<16x1xf32>
    %119 = vector.broadcast %118 : vector<16x1xf32> to vector<16x32xf32>
    %120 = arith.subf %112, %119 : vector<16x32xf32>
    %121 = arith.mulf %120, %120 : vector<16x32xf32>
    %cst_47 = arith.constant dense<0.000000e+00> : vector<16xf32>
    %122 = vector.multi_reduction <add>, %121, %cst_47 [1] : vector<16x32xf32> to vector<16xf32>
    %123 = vector.shape_cast %122 : vector<16xf32> to vector<16x1xf32>
    %cst_48 = arith.constant 3.200000e+01 : f32
    %124 = vector.broadcast %cst_48 : f32 to vector<16x1xf32>
    %125 = arith.divf %123, %124 : vector<16x1xf32>
    %126 = vector.broadcast %118 : vector<16x1xf32> to vector<16x32xf32>
    %127 = arith.subf %112, %126 : vector<16x32xf32>
    %cst_49 = arith.constant 9.99999974E-6 : f32
    %128 = vector.broadcast %cst_49 : f32 to vector<16x1xf32>
    %129 = arith.addf %125, %128 : vector<16x1xf32>
    %130 = math.rsqrt %129 : vector<16x1xf32>
    %131 = vector.broadcast %130 : vector<16x1xf32> to vector<16x32xf32>
    %132 = arith.mulf %127, %131 : vector<16x32xf32>
    %133 = vector.broadcast %113 : vector<1x32xf32> to vector<16x32xf32>
    %134 = arith.mulf %132, %133 : vector<16x32xf32>
    %135 = vector.broadcast %114 : vector<1x32xf32> to vector<16x32xf32>
    %136 = arith.addf %134, %135 : vector<16x32xf32>
    %c0_50 = arith.constant 0 : index
    %c0_51 = arith.constant 0 : index
    %137 = vector.load %arg10[%c0_50, %c0_51] : memref<32x128xf32, #tpu.memory_space<vmem>>, vector<32x128xf32>
    %cst_52 = arith.constant dense<0.000000e+00> : vector<16x128xf32>
    %138 = tpu.matmul %136, %137, %cst_52 {dimension_numbers = #tpu.dot_dimension_numbers<[1], [0], [0], [1], [0, 0, 1, 1], [], []>} : vector<16x32xf32>, vector<32x128xf32>, vector<16x128xf32> -> vector<16x128xf32>
    %c0_53 = arith.constant 0 : index
    %c0_54 = arith.constant 0 : index
    %139 = vector.load %arg11[%c0_53, %c0_54] : memref<1x128xf32, #tpu.memory_space<vmem>>, vector<1x128xf32>
    %140 = vector.broadcast %139 : vector<1x128xf32> to vector<16x128xf32>
    %141 = arith.addf %138, %140 : vector<16x128xf32>
    %142 = arith.negf %141 : vector<16x128xf32>
    %143 = math.exp %142 : vector<16x128xf32>
    %cst_55 = arith.constant 1.000000e+00 : f32
    %144 = vector.broadcast %cst_55 : f32 to vector<16x128xf32>
    %145 = arith.addf %144, %143 : vector<16x128xf32>
    %146 = arith.divf %144, %145 : vector<16x128xf32>
    %147 = arith.mulf %141, %146 : vector<16x128xf32>
    %c0_56 = arith.constant 0 : index
    %c0_57 = arith.constant 0 : index
    %148 = vector.load %arg12[%c0_56, %c0_57] : memref<128x32xf32, #tpu.memory_space<vmem>>, vector<128x32xf32>
    %cst_58 = arith.constant dense<0.000000e+00> : vector<16x32xf32>
    %149 = tpu.matmul %147, %148, %cst_58 {dimension_numbers = #tpu.dot_dimension_numbers<[1], [0], [0], [1], [0, 0, 1, 1], [], []>} : vector<16x128xf32>, vector<128x32xf32>, vector<16x32xf32> -> vector<16x32xf32>
    %c0_59 = arith.constant 0 : index
    %c0_60 = arith.constant 0 : index
    %150 = vector.load %arg13[%c0_59, %c0_60] : memref<1x32xf32, #tpu.memory_space<vmem>>, vector<1x32xf32>
    %151 = vector.broadcast %150 : vector<1x32xf32> to vector<16x32xf32>
    %152 = arith.addf %149, %151 : vector<16x32xf32>
    %153 = arith.addf %112, %152 : vector<16x32xf32>
    %c0_61 = arith.constant 0 : index
    %c0_62 = arith.constant 0 : index
    %154 = vector.load %arg14[%c0_61, %c0_62] : memref<16x32xf32, #tpu.memory_space<vmem>>, vector<16x32xf32>
    tpu.vector_store %arg14[%c0_61, %c0_62], %153 {strides = array<i32>} : memref<16x32xf32, #tpu.memory_space<vmem>>, vector<16x32xf32>,
    return
  }
}

</mosaic_0001>

<llo_original>
// kernel: tpu_custom_call.1
$region0: #{tpu_custom_call.1}
  #allocation0 [shape = 'u32[]', space=smem, size = 0x4, offset = 0x4, fixed_abs, tag = 'smem constant byte address 0x4 - core index']
  #allocation1 [shape = 'u32[144,128]{1,0:T(1,128)}', space=vmem, size = 0x12000, scoped, tag = 'internal scratch']
  %s0 = inlined_call_operand.vmem [shape: f32[16,32], index: 0, kind: input, shape index: {}]
  %s1 = inlined_call_operand.vmem [shape: f32[16,16], index: 1, kind: input, shape index: {}]
  %s2 = inlined_call_operand.vmem [shape: f32[1,32], index: 2, kind: input, shape index: {}]
  %s3 = inlined_call_operand.vmem [shape: f32[1,32], index: 3, kind: input, shape index: {}]
  %s4 = inlined_call_operand.vmem [shape: f32[32,96], index: 4, kind: input, shape index: {}]
  %s5 = inlined_call_operand.vmem [shape: f32[1,96], index: 5, kind: input, shape index: {}]
  %s6 = inlined_call_operand.vmem [shape: f32[32,32], index: 6, kind: input, shape index: {}]
  %s7 = inlined_call_operand.vmem [shape: f32[1,32], index: 7, kind: input, shape index: {}]
  %s8 = inlined_call_operand.vmem [shape: f32[1,32], index: 8, kind: input, shape index: {}]
  %s9 = inlined_call_operand.vmem [shape: f32[1,32], index: 9, kind: input, shape index: {}]
  %s10 = inlined_call_operand.vmem [shape: f32[32,128], index: 10, kind: input, shape index: {}]
  %s11 = inlined_call_operand.vmem [shape: f32[1,128], index: 11, kind: input, shape index: {}]
  %s12 = inlined_call_operand.vmem [shape: f32[128,32], index: 12, kind: input, shape index: {}]
  %s13 = inlined_call_operand.vmem [shape: f32[1,32], index: 13, kind: input, shape index: {}]
  %s14 = inlined_call_operand.hbm [shape: f32[16,32], index: 14, kind: output, shape index: {}]
  %s15 = sld [smem:[#allocation0]]
  $region66: #{tpu_custom_call.1} parent=0
    _
  %s17 = ssub.s32 1, %s15
  %s18 = scalar_select 0, %s17, %s15
  $region1: #{tpu_custom_call.1} parent=0
    #allocation2 [shape = 'u8[8192]{0}', space=vmem, size = 0x2000, scoped, tag = 'output window, operand 0, single buffered']
    #allocation3 [shape = 's32[1]{0}', space=sflag, size = 0x4, scoped, tag = 'scoped memory for tpu_custom_call.1']
    %19 = vsyncpa [#allocation3], 0
    // Predicated region
    $region2: #{tpu_custom_call.1} parent=1 // pred_check
      _
    $region3: #{tpu_custom_call.1} parent=1 // pred_check_branch
      %21 = sbr.rel (0) target = $region5
    $region4: #{tpu_custom_call.1} parent=1 // pred_region
      _
    $region5: #{tpu_custom_call.1} parent=1 // pred_fallthru
      _
    // Predicated region
    $region6: #{tpu_custom_call.1} parent=1 // pred_check
      _
    $region7: #{tpu_custom_call.1} parent=1 // pred_check_branch
      %23 = sbr.rel (0) target = $region9
    $region8: #{tpu_custom_call.1} parent=1 // pred_region
      _
    $region9: #{tpu_custom_call.1} parent=1 // pred_fallthru
      _
    // Predicated region
    $region10: #{tpu_custom_call.1} parent=1 // pred_check
      _
    $region11: #{tpu_custom_call.1} parent=1 // pred_check_branch
      %25 = sbr.rel (0) target = $region13
    $region12: #{tpu_custom_call.1} parent=1 // pred_region
      _
    $region13: #{tpu_custom_call.1} parent=1 // pred_fallthru
      _
    // Predicated region
    $region14: #{tpu_custom_call.1} parent=1 // pred_check
      _
    $region15: #{tpu_custom_call.1} parent=1 // pred_check_branch
      %27 = sbr.rel (0) target = $region17
    $region16: #{tpu_custom_call.1} parent=1 // pred_region
      _
    $region17: #{tpu_custom_call.1} parent=1 // pred_fallthru
      _
    // Predicated region
    $region18: #{tpu_custom_call.1} parent=1 // pred_check
      _
    $region19: #{tpu_custom_call.1} parent=1 // pred_check_branch
      %29 = sbr.rel (0) target = $region21
    $region20: #{tpu_custom_call.1} parent=1 // pred_region
      _
    $region21: #{tpu_custom_call.1} parent=1 // pred_fallthru
      _
    // Predicated region
    $region22: #{tpu_custom_call.1} parent=1 // pred_check
      _
    $region23: #{tpu_custom_call.1} parent=1 // pred_check_branch
      %31 = sbr.rel (0) target = $region25
    $region24: #{tpu_custom_call.1} parent=1 // pred_region
      _
    $region25: #{tpu_custom_call.1} parent=1 // pred_fallthru
      _
    // Predicated region
    $region26: #{tpu_custom_call.1} parent=1 // pred_check
      _
    $region27: #{tpu_custom_call.1} parent=1 // pred_check_branch
      %33 = sbr.rel (0) target = $region29
    $region28: #{tpu_custom_call.1} parent=1 // pred_region
      _
    $region29: #{tpu_custom_call.1} parent=1 // pred_fallthru
      _
    // Predicated region
    $region30: #{tpu_custom_call.1} parent=1 // pred_check
      _
    $region31: #{tpu_custom_call.1} parent=1 // pred_check_branch
      %35 = sbr.rel (0) target = $region33
    $region32: #{tpu_custom_call.1} parent=1 // pred_region
      _
    $region33: #{tpu_custom_call.1} parent=1 // pred_fallthru
      _
    // Predicated region
    $region34: #{tpu_custom_call.1} parent=1 // pred_check
      _
    $region35: #{tpu_custom_call.1} parent=1 // pred_check_branch
      %37 = sbr.rel (0) target = $region37
    $region36: #{tpu_custom_call.1} parent=1 // pred_region
      _
    $region37: #{tpu_custom_call.1} parent=1 // pred_fallthru
      _
    // Predicated region
    $region38: #{tpu_custom_call.1} parent=1 // pred_check
      _
    $region39: #{tpu_custom_call.1} parent=1 // pred_check_branch
      %39 = sbr.rel (0) target = $region41
    $region40: #{tpu_custom_call.1} parent=1 // pred_region
      _
    $region41: #{tpu_custom_call.1} parent=1 // pred_fallthru
      _
    // Predicated region
    $region42: #{tpu_custom_call.1} parent=1 // pred_check
      _
    $region43: #{tpu_custom_call.1} parent=1 // pred_check_branch
      %41 = sbr.rel (0) target = $region45
    $region44: #{tpu_custom_call.1} parent=1 // pred_region
      _
    $region45: #{tpu_custom_call.1} parent=1 // pred_fallthru
      _
    // Predicated region
    $region46: #{tpu_custom_call.1} parent=1 // pred_check
      _
    $region47: #{tpu_custom_call.1} parent=1 // pred_check_branch
      %43 = sbr.rel (0) target = $region49
    $region48: #{tpu_custom_call.1} parent=1 // pred_region
      _
    $region49: #{tpu_custom_call.1} parent=1 // pred_fallthru
      _
    // Predicated region
    $region50: #{tpu_custom_call.1} parent=1 // pred_check
      _
    $region51: #{tpu_custom_call.1} parent=1 // pred_check_branch
      %45 = sbr.rel (0) target = $region53
    $region52: #{tpu_custom_call.1} parent=1 // pred_region
      _
    $region53: #{tpu_custom_call.1} parent=1 // pred_fallthru
      _
    // Predicated region
    $region54: #{tpu_custom_call.1} parent=1 // pred_check
      _
    $region55: #{tpu_custom_call.1} parent=1 // pred_check_branch
      %47 = sbr.rel (0) target = $region57
    $region56: #{tpu_custom_call.1} parent=1 // pred_region
      _
    $region57: #{tpu_custom_call.1} parent=1 // pred_fallthru
      _
    %v48 = vld [vmem:[%s0] sm:$0xff]
    %v49 = vld [vmem:[%s0 + $0x8] sm:$0xff]
    %v50 = vld [vmem:[%s2] sm:$0x1]
    %v51 = vld [vmem:[%s3] sm:$0x1]
    %vm52 = vcmask 261120
    %v53 = vsel %vm52, %v48, 0.0
    %54 = vadd.xlane.f32.xlu0 %v53
    %v55 = vpop.xlane.xlu0 %54
    %v56 = vsel %vm52, %v49, 0.0
    %57 = vadd.xlane.f32.xlu0 %v56
    %v58 = vpop.xlane.xlu0 %57
    %v59 = vrcp.pop 32.0
    %v60 = vmul.f32 %v55, %v59
    %v61 = vmul.f32 %v58, %v59
    %v62 = vsub.f32 %v48, %v60
    %v63 = vsub.f32 %v49, %v61
    %v64 = vmul.f32 %v62, %v62
    %v65 = vmul.f32 %v63, %v63
    %v66 = vsel %vm52, %v64, 0.0
    %67 = vadd.xlane.f32.xlu0 %v66
    %v68 = vpop.xlane.xlu0 %67
    %v69 = vsel %vm52, %v65, 0.0
    %70 = vadd.xlane.f32.xlu0 %v69
    %v71 = vpop.xlane.xlu0 %70
    %v72 = vmul.f32 %v68, %v59
    %v73 = vmul.f32 %v71, %v59
    %v74 = vadd.f32 %v72, 1e-05
    %v75 = vadd.f32 %v73, 1e-05
    %v76 = vrsqrt.pop %v74
    %v77 = vrsqrt.pop %v75
    %v78 = vmul.f32 %v62, %v76
    %v79 = vmul.f32 %v63, %v77
    %v81 = vlaneseq
    %v82 = vshrl.u32 %v81, 7
    %v83 = vsub.s32 0, %v82
    %v84 = vrot.slane %v50, %v83
    %v86 = vmul.f32 %v78, %v84
    %v87 = vmul.f32 %v79, %v84
    %v89 = vlaneseq
    %v90 = vshrl.u32 %v89, 7
    %v91 = vsub.s32 0, %v90
    %v92 = vrot.slane %v51, %v91
    %v94 = vadd.f32 %v86, %v92
    %v95 = vadd.f32 %v87, %v92
    %v96 = vld [vmem:[%s4] sm:$0xff]
    %v97 = vld [vmem:[%s4 + $0x8] sm:$0xff]
    %v98 = vld [vmem:[%s4 + $0x10] sm:$0xff]
    %v99 = vld [vmem:[%s4 + $0x18] sm:$0xff]
    %v100 = vld [vmem:[%s5] sm:$0x1]
    %v102 = vlaneseq
    %v103 = vshrl.u32 %v102, 7
    %v104 = vsub.s32 0, %v103
    %v105 = vrot.slane %v100, %v104
    %v108 = vsel %vm52, %v94, 0
    %v111 = vsel %vm52, %v95, 0
    %113 = vmatprep.subr.mxu0 0.0
    %114 = vmatpush1.msra.mxu0 %v96
    %115 = vmatprep.subr.mxu0 0.0
    %116 = vmatpush1.msra.mxu0 %v97
    %117 = vmatprep.subr.mxu0 0.0
    %118 = vmatpush1.msra.mxu0 %v98
    %119 = vmatprep.subr.mxu0 0.0
    %120 = vmatpush1.msra.mxu0 %v99
    %121 = vmatprep.subr.mxu0 0.0
    %122 = vmatpush1.msra.mxu0 0.0
    %123 = vmatprep.subr.mxu0 0.0
    %124 = vmatpush1.msra.mxu0 0.0
    %125 = vmatprep.subr.mxu0 0.0
    %126 = vmatpush1.msra.mxu0 0.0
    %127 = vmatprep.subr.mxu0 0.0
    %128 = vmatpush1.msra.mxu0 0.0
    %129 = vmatprep.subr.mxu0 0.0
    %130 = vmatpush1.msra.mxu0 0.0
    %131 = vmatprep.subr.mxu0 0.0
    %132 = vmatpush1.msra.mxu0 0.0
    %133 = vmatprep.subr.mxu0 0.0
    %134 = vmatpush1.msra.mxu0 0.0
    %135 = vmatprep.subr.mxu0 0.0
    %136 = vmatpush1.msra.mxu0 0.0
    %137 = vmatprep.subr.mxu0 0.0
    %138 = vmatpush1.msra.mxu0 0.0
    %139 = vmatprep.subr.mxu0 0.0
    %140 = vmatpush1.msra.mxu0 0.0
    %141 = vmatprep.subr.mxu0 0.0
    %142 = vmatpush1.msra.mxu0 0.0
    %143 = vmatprep.subr.mxu0 0.0
    %144 = vmatpush1.msra.mxu0 0.0
    %145 = vmatprep.subr.mxu0 0.0
    %146 = vmatpush1.msra.mxu0 0.0
    %147 = vmatprep.subr.mxu0 0.0
    %148 = vmatpush1.msra.mxu0 0.0
    %149 = vmatprep.subr.mxu0 0.0
    %150 = vmatpush1.msra.mxu0 0.0
    %151 = vmatprep.subr.mxu0 0.0
    %152 = vmatpush1.msra.mxu0 0.0
    %153 = vmatprep.subr.mxu0 0.0
    %154 = vmatpush1.msra.mxu0 0.0
    %155 = vmatprep.subr.mxu0 0.0
    %156 = vmatpush1.msra.mxu0 0.0
    %157 = vmatprep.subr.mxu0 0.0
    %158 = vmatpush1.msra.mxu0 0.0
    %159 = vmatprep.subr.mxu0 0.0
    %160 = vmatpush1.msra.mxu0 0.0
    %161 = vmatprep.subr.mxu0 0.0
    %162 = vmatpush1.msra.mxu0 0.0
    %163 = vmatprep.subr.mxu0 0.0
    %164 = vmatpush1.msra.mxu0 0.0
    %165 = vmatprep.subr.mxu0 0.0
    %166 = vmatpush1.msra.mxu0 0.0
    %167 = vmatprep.subr.mxu0 0.0
    %168 = vmatpush1.msra.mxu0 0.0
    %169 = vmatprep.subr.mxu0 0.0
    %170 = vmatpush1.msra.mxu0 0.0
    %171 = vmatprep.subr.mxu0 0.0
    %172 = vmatpush1.msra.mxu0 0.0
    %173 = vmatprep.subr.mxu0 0.0
    %174 = vmatpush1.msra.mxu0 0.0
    %175 = vmatprep.subr.mxu0 0.0
    %176 = vmatpush1.msra.mxu0 0.0
    %177 = vmatprep.mubr.f32.mxu0 0.0
    %178 = vmatmul.mubr.f32.gmra.mrb[0].mxu0 %v108
    %v179 = vpop.f32.mrb[0].mxu0
    %v180 = vadd.f32 %v105, %v179
    %v181 = vpop.f32.mrb[0].mxu0
    %182 = vmatprep.mubr.f32.mxu0 0.0
    %183 = vmatmul.mubr.f32.gmra.mrb[0].mxu0 %v111
    %v184 = vpop.f32.mrb[0].mxu0
    %v185 = vadd.f32 %v105, %v184
    %v186 = vpop.f32.mrb[0].mxu0
    %187 = vdwg.mxu0
    %v188 = vld [vmem:[%s1] sm:$0xff]
    %v189 = vld [vmem:[%s1 + $0x8] sm:$0xff]
    %192 = vrot.lane.b32.xlu0 %v180, 96
    %v193 = vpop.permute.xlu0 %192
    %194 = vrot.lane.b32.xlu0 %v185, 96
    %v195 = vpop.permute.xlu0 %194
    %vm196 = vcmask 64512
    %v197 = vsel %vm196, %v180, 0
    %v199 = vsel %vm196, %v185, 0
    %v201 = vsel %vm196, %v193, 0
    %v203 = vsel %vm196, %v195, 0
    %205 = vmatprep.subr.mxu0 0.0
    %206 = vmatpush1.xpose.msra.mxu0 %v201
    %207 = vmatprep.subr.mxu0 0.0
    %208 = vmatpush1.xpose.msra.mxu0 %v203
    %209 = vmatprep.subr.mxu0 0.0
    %210 = vmatpush1.xpose.msra.mxu0 0.0
    %211 = vmatprep.subr.mxu0 0.0
    %212 = vmatpush1.xpose.msra.mxu0 0.0
    %213 = vmatprep.subr.mxu0 0.0
    %214 = vmatpush1.xpose.msra.mxu0 0.0
    %215 = vmatprep.subr.mxu0 0.0
    %216 = vmatpush1.xpose.msra.mxu0 0.0
    %217 = vmatprep.subr.mxu0 0.0
    %218 = vmatpush1.xpose.msra.mxu0 0.0
    %219 = vmatprep.subr.mxu0 0.0
    %220 = vmatpush1.xpose.msra.mxu0 0.0
    %221 = vmatprep.subr.mxu0 0.0
    %222 = vmatpush1.xpose.msra.mxu0 0.0
    %223 = vmatprep.subr.mxu0 0.0
    %224 = vmatpush1.xpose.msra.mxu0 0.0
    %225 = vmatprep.subr.mxu0 0.0
    %226 = vmatpush1.xpose.msra.mxu0 0.0
    %227 = vmatprep.subr.mxu0 0.0
    %228 = vmatpush1.xpose.msra.mxu0 0.0
    %229 = vmatprep.subr.mxu0 0.0
    %230 = vmatpush1.xpose.msra.mxu0 0.0
    %231 = vmatprep.subr.mxu0 0.0
    %232 = vmatpush1.xpose.msra.mxu0 0.0
    %233 = vmatprep.subr.mxu0 0.0
    %234 = vmatpush1.xpose.msra.mxu0 0.0
    %235 = vmatprep.subr.mxu0 0.0
    %236 = vmatpush1.xpose.msra.mxu0 0.0
    %237 = vmatprep.subr.mxu0 0.0
    %238 = vmatpush1.xpose.msra.mxu0 0.0
    %239 = vmatprep.subr.mxu0 0.0
    %240 = vmatpush1.xpose.msra.mxu0 0.0
    %241 = vmatprep.subr.mxu0 0.0
    %242 = vmatpush1.xpose.msra.mxu0 0.0
    %243 = vmatprep.subr.mxu0 0.0
    %244 = vmatpush1.xpose.msra.mxu0 0.0
    %245 = vmatprep.subr.mxu0 0.0
    %246 = vmatpush1.xpose.msra.mxu0 0.0
    %247 = vmatprep.subr.mxu0 0.0
    %248 = vmatpush1.xpose.msra.mxu0 0.0
    %249 = vmatprep.subr.mxu0 0.0
    %250 = vmatpush1.xpose.msra.mxu0 0.0
    %251 = vmatprep.subr.mxu0 0.0
    %252 = vmatpush1.xpose.msra.mxu0 0.0
    %253 = vmatprep.subr.mxu0 0.0
    %254 = vmatpush1.xpose.msra.mxu0 0.0
    %255 = vmatprep.subr.mxu0 0.0
    %256 = vmatpush1.xpose.msra.mxu0 0.0
    %257 = vmatprep.subr.mxu0 0.0
    %258 = vmatpush1.xpose.msra.mxu0 0.0
    %259 = vmatprep.subr.mxu0 0.0
    %260 = vmatpush1.xpose.msra.mxu0 0.0
    %261 = vmatprep.subr.mxu0 0.0
    %262 = vmatpush1.xpose.msra.mxu0 0.0
    %263 = vmatprep.subr.mxu0 0.0
    %264 = vmatpush1.xpose.msra.mxu0 0.0
    %265 = vmatprep.subr.mxu0 0.0
    %266 = vmatpush1.xpose.msra.mxu0 0.0
    %267 = vmatprep.subr.mxu0 0.0
    %268 = vmatpush1.xpose.msra.mxu0 0.0
    %269 = vmatprep.mubr.f32.mxu0 0.0
    %270 = vmatmul.mubr.f32.gmra.mrb[0].mxu0 %v197
    %v271 = vpop.f32.mrb[0].mxu0
    %v272 = vadd.f32 0.0, %v271
    %v273 = vpop.f32.mrb[0].mxu0
    %274 = vmatprep.mubr.f32.mxu0 0.0
    %275 = vmatmul.mubr.f32.gmra.mrb[0].mxu0 %v199
    %v276 = vpop.f32.mrb[0].mxu0
    %v277 = vadd.f32 0.0, %v276
    %v278 = vpop.f32.mrb[0].mxu0
    %279 = vdwg.mxu0
    %v280 = vmul.f32 %v272, 0.35355338
    %v281 = vmul.f32 %v277, 0.35355338
    %v282 = vadd.f32 %v280, %v188
    %v283 = vadd.f32 %v281, %v189
    %vm284 = vcmask 130048
    %v285 = vsel %vm284, %v282, -inf
    %286 = vmax.xlane.f32.xlu0 %v285
    %v287 = vpop.xlane.xlu0 %286
    %v288 = vsel %vm284, %v283, -inf
    %289 = vmax.xlane.f32.xlu0 %v288
    %v290 = vpop.xlane.xlu0 %289
    %v291 = vsub.f32 %v282, %v287
    %v292 = vsub.f32 %v283, %v290
    %v293 = vmul.f32 %v291, 1.442695
    %v294 = vpow.pop %v293
    %v295 = vmul.f32 %v292, 1.442695
    %v296 = vpow.pop %v295
    %v297 = vsel %vm284, %v294, 0.0
    %298 = vadd.xlane.f32.xlu0 %v297
    %v299 = vpop.xlane.xlu0 %298
    %v300 = vsel %vm284, %v296, 0.0
    %301 = vadd.xlane.f32.xlu0 %v300
    %v302 = vpop.xlane.xlu0 %301
    %v303 = vrcp.pop %v299
    %v304 = vrcp.pop %v302
    %v305 = vmul.f32 %v294, %v303
    %v306 = vmul.f32 %v296, %v304
    %307 = vrot.lane.b32.xlu0 %v180, 64
    %v308 = vpop.permute.xlu0 %307
    %309 = vrot.lane.b32.xlu0 %v185, 64
    %v310 = vpop.permute.xlu0 %309
    %v314 = vsel %vm284, %v305, 0
    %v317 = vsel %vm284, %v306, 0
    %319 = vmatprep.subr.mxu0 0.0
    %320 = vmatpush1.msra.mxu0 %v308
    %321 = vmatprep.subr.mxu0 0.0
    %322 = vmatpush1.msra.mxu0 %v310
    %323 = vmatprep.subr.mxu0 0.0
    %324 = vmatpush1.msra.mxu0 0.0
    %325 = vmatprep.subr.mxu0 0.0
    %326 = vmatpush1.msra.mxu0 0.0
    %327 = vmatprep.subr.mxu0 0.0
    %328 = vmatpush1.msra.mxu0 0.0
    %329 = vmatprep.subr.mxu0 0.0
    %330 = vmatpush1.msra.mxu0 0.0
    %331 = vmatprep.subr.mxu0 0.0
    %332 = vmatpush1.msra.mxu0 0.0
    %333 = vmatprep.subr.mxu0 0.0
    %334 = vmatpush1.msra.mxu0 0.0
    %335 = vmatprep.subr.mxu0 0.0
    %336 = vmatpush1.msra.mxu0 0.0
    %337 = vmatprep.subr.mxu0 0.0
    %338 = vmatpush1.msra.mxu0 0.0
    %339 = vmatprep.subr.mxu0 0.0
    %340 = vmatpush1.msra.mxu0 0.0
    %341 = vmatprep.subr.mxu0 0.0
    %342 = vmatpush1.msra.mxu0 0.0
    %343 = vmatprep.subr.mxu0 0.0
    %344 = vmatpush1.msra.mxu0 0.0
    %345 = vmatprep.subr.mxu0 0.0
    %346 = vmatpush1.msra.mxu0 0.0
    %347 = vmatprep.subr.mxu0 0.0
    %348 = vmatpush1.msra.mxu0 0.0
    %349 = vmatprep.subr.mxu0 0.0
    %350 = vmatpush1.msra.mxu0 0.0
    %351 = vmatprep.subr.mxu0 0.0
    %352 = vmatpush1.msra.mxu0 0.0
    %353 = vmatprep.subr.mxu0 0.0
    %354 = vmatpush1.msra.mxu0 0.0
    %355 = vmatprep.subr.mxu0 0.0
    %356 = vmatpush1.msra.mxu0 0.0
    %357 = vmatprep.subr.mxu0 0.0
    %358 = vmatpush1.msra.mxu0 0.0
    %359 = vmatprep.subr.mxu0 0.0
    %360 = vmatpush1.msra.mxu0 0.0
    %361 = vmatprep.subr.mxu0 0.0
    %362 = vmatpush1.msra.mxu0 0.0
    %363 = vmatprep.subr.mxu0 0.0
    %364 = vmatpush1.msra.mxu0 0.0
    %365 = vmatprep.subr.mxu0 0.0
    %366 = vmatpush1.msra.mxu0 0.0
    %367 = vmatprep.subr.mxu0 0.0
    %368 = vmatpush1.msra.mxu0 0.0
    %369 = vmatprep.subr.mxu0 0.0
    %370 = vmatpush1.msra.mxu0 0.0
    %371 = vmatprep.subr.mxu0 0.0
    %372 = vmatpush1.msra.mxu0 0.0
    %373 = vmatprep.subr.mxu0 0.0
    %374 = vmatpush1.msra.mxu0 0.0
    %375 = vmatprep.subr.mxu0 0.0
    %376 = vmatpush1.msra.mxu0 0.0
    %377 = vmatprep.subr.mxu0 0.0
    %378 = vmatpush1.msra.mxu0 0.0
    %379 = vmatprep.subr.mxu0 0.0
    %380 = vmatpush1.msra.mxu0 0.0
    %381 = vmatprep.subr.mxu0 0.0
    %382 = vmatpush1.msra.mxu0 0.0
    %383 = vmatprep.mubr.f32.mxu0 0.0
    %384 = vmatmul.mubr.f32.gmra.mrb[0].mxu0 %v314
    %v385 = vpop.f32.mrb[0].mxu0
    %v386 = vadd.f32 0.0, %v385
    %v387 = vpop.f32.mrb[0].mxu0
    %388 = vmatprep.mubr.f32.mxu0 0.0
    %389 = vmatmul.mubr.f32.gmra.mrb[0].mxu0 %v317
    %v390 = vpop.f32.mrb[0].mxu0
    %v391 = vadd.f32 0.0, %v390
    %v392 = vpop.f32.mrb[0].mxu0
    %393 = vdwg.mxu0
    %394 = vrot.lane.b32.xlu0 %v180, 120
    %v395 = vpop.permute.xlu0 %394
    %396 = vrot.lane.b32.xlu0 %v185, 120
    %v397 = vpop.permute.xlu0 %396
    %398 = vrot.lane.b32.xlu0 %v180, 88
    %v399 = vpop.permute.xlu0 %398
    %400 = vrot.lane.b32.xlu0 %v185, 88
    %v401 = vpop.permute.xlu0 %400
    %v402 = vsel %vm196, %v395, 0
    %v404 = vsel %vm196, %v397, 0
    %v406 = vsel %vm196, %v399, 0
    %v408 = vsel %vm196, %v401, 0
    %410 = vmatprep.subr.mxu0 0.0
    %411 = vmatpush1.xpose.msra.mxu0 %v406
    %412 = vmatprep.subr.mxu0 0.0
    %413 = vmatpush1.xpose.msra.mxu0 %v408
    %414 = vmatprep.subr.mxu0 0.0
    %415 = vmatpush1.xpose.msra.mxu0 0.0
    %416 = vmatprep.subr.mxu0 0.0
    %417 = vmatpush1.xpose.msra.mxu0 0.0
    %418 = vmatprep.subr.mxu0 0.0
    %419 = vmatpush1.xpose.msra.mxu0 0.0
    %420 = vmatprep.subr.mxu0 0.0
    %421 = vmatpush1.xpose.msra.mxu0 0.0
    %422 = vmatprep.subr.mxu0 0.0
    %423 = vmatpush1.xpose.msra.mxu0 0.0
    %424 = vmatprep.subr.mxu0 0.0
    %425 = vmatpush1.xpose.msra.mxu0 0.0
    %426 = vmatprep.subr.mxu0 0.0
    %427 = vmatpush1.xpose.msra.mxu0 0.0
    %428 = vmatprep.subr.mxu0 0.0
    %429 = vmatpush1.xpose.msra.mxu0 0.0
    %430 = vmatprep.subr.mxu0 0.0
    %431 = vmatpush1.xpose.msra.mxu0 0.0
    %432 = vmatprep.subr.mxu0 0.0
    %433 = vmatpush1.xpose.msra.mxu0 0.0
    %434 = vmatprep.subr.mxu0 0.0
    %435 = vmatpush1.xpose.msra.mxu0 0.0
    %436 = vmatprep.subr.mxu0 0.0
    %437 = vmatpush1.xpose.msra.mxu0 0.0
    %438 = vmatprep.subr.mxu0 0.0
    %439 = vmatpush1.xpose.msra.mxu0 0.0
    %440 = vmatprep.subr.mxu0 0.0
    %441 = vmatpush1.xpose.msra.mxu0 0.0
    %442 = vmatprep.subr.mxu0 0.0
    %443 = vmatpush1.xpose.msra.mxu0 0.0
    %444 = vmatprep.subr.mxu0 0.0
    %445 = vmatpush1.xpose.msra.mxu0 0.0
    %446 = vmatprep.subr.mxu0 0.0
    %447 = vmatpush1.xpose.msra.mxu0 0.0
    %448 = vmatprep.subr.mxu0 0.0
    %449 = vmatpush1.xpose.msra.mxu0 0.0
    %450 = vmatprep.subr.mxu0 0.0
    %451 = vmatpush1.xpose.msra.mxu0 0.0
    %452 = vmatprep.subr.mxu0 0.0
    %453 = vmatpush1.xpose.msra.mxu0 0.0
    %454 = vmatprep.subr.mxu0 0.0
    %455 = vmatpush1.xpose.msra.mxu0 0.0
    %456 = vmatprep.subr.mxu0 0.0
    %457 = vmatpush1.xpose.msra.mxu0 0.0
    %458 = vmatprep.subr.mxu0 0.0
    %459 = vmatpush1.xpose.msra.mxu0 0.0
    %460 = vmatprep.subr.mxu0 0.0
    %461 = vmatpush1.xpose.msra.mxu0 0.0
    %462 = vmatprep.subr.mxu0 0.0
    %463 = vmatpush1.xpose.msra.mxu0 0.0
    %464 = vmatprep.subr.mxu0 0.0
    %465 = vmatpush1.xpose.msra.mxu0 0.0
    %466 = vmatprep.subr.mxu0 0.0
    %467 = vmatpush1.xpose.msra.mxu0 0.0
    %468 = vmatprep.subr.mxu0 0.0
    %469 = vmatpush1.xpose.msra.mxu0 0.0
    %470 = vmatprep.subr.mxu0 0.0
    %471 = vmatpush1.xpose.msra.mxu0 0.0
    %472 = vmatprep.subr.mxu0 0.0
    %473 = vmatpush1.xpose.msra.mxu0 0.0
    %474 = vmatprep.mubr.f32.mxu0 0.0
    %475 = vmatmul.mubr.f32.gmra.mrb[0].mxu0 %v402
    %v476 = vpop.f32.mrb[0].mxu0
    %v477 = vadd.f32 0.0, %v476
    %v478 = vpop.f32.mrb[0].mxu0
    %479 = vmatprep.mubr.f32.mxu0 0.0
    %480 = vmatmul.mubr.f32.gmra.mrb[0].mxu0 %v404
    %v481 = vpop.f32.mrb[0].mxu0
    %v482 = vadd.f32 0.0, %v481
    %v483 = vpop.f32.mrb[0].mxu0
    %484 = vdwg.mxu0
    %v485 = vmul.f32 %v477, 0.35355338
    %v486 = vmul.f32 %v482, 0.35355338
    %v487 = vadd.f32 %v485, %v188
    %v488 = vadd.f32 %v486, %v189
    %v489 = vsel %vm284, %v487, -inf
    %490 = vmax.xlane.f32.xlu0 %v489
    %v491 = vpop.xlane.xlu0 %490
    %v492 = vsel %vm284, %v488, -inf
    %493 = vmax.xlane.f32.xlu0 %v492
    %v494 = vpop.xlane.xlu0 %493
    %v495 = vsub.f32 %v487, %v491
    %v496 = vsub.f32 %v488, %v494
    %v497 = vmul.f32 %v495, 1.442695
    %v498 = vpow.pop %v497
    %v499 = vmul.f32 %v496, 1.442695
    %v500 = vpow.pop %v499
    %v501 = vsel %vm284, %v498, 0.0
    %502 = vadd.xlane.f32.xlu0 %v501
    %v503 = vpop.xlane.xlu0 %502
    %v504 = vsel %vm284, %v500, 0.0
    %505 = vadd.xlane.f32.xlu0 %v504
    %v506 = vpop.xlane.xlu0 %505
    %v507 = vrcp.pop %v503
    %v508 = vrcp.pop %v506
    %v509 = vmul.f32 %v498, %v507
    %v510 = vmul.f32 %v500, %v508
    %511 = vrot.lane.b32.xlu0 %v180, 56
    %v512 = vpop.permute.xlu0 %511
    %513 = vrot.lane.b32.xlu0 %v185, 56
    %v514 = vpop.permute.xlu0 %513
    %v518 = vsel %vm284, %v509, 0
    %v521 = vsel %vm284, %v510, 0
    %523 = vmatprep.subr.mxu0 0.0
    %524 = vmatpush1.msra.mxu0 %v512
    %525 = vmatprep.subr.mxu0 0.0
    %526 = vmatpush1.msra.mxu0 %v514
    %527 = vmatprep.subr.mxu0 0.0
    %528 = vmatpush1.msra.mxu0 0.0
    %529 = vmatprep.subr.mxu0 0.0
    %530 = vmatpush1.msra.mxu0 0.0
    %531 = vmatprep.subr.mxu0 0.0
    %532 = vmatpush1.msra.mxu0 0.0
    %533 = vmatprep.subr.mxu0 0.0
    %534 = vmatpush1.msra.mxu0 0.0
    %535 = vmatprep.subr.mxu0 0.0
    %536 = vmatpush1.msra.mxu0 0.0
    %537 = vmatprep.subr.mxu0 0.0
    %538 = vmatpush1.msra.mxu0 0.0
    %539 = vmatprep.subr.mxu0 0.0
    %540 = vmatpush1.msra.mxu0 0.0
    %541 = vmatprep.subr.mxu0 0.0
    %542 = vmatpush1.msra.mxu0 0.0
    %543 = vmatprep.subr.mxu0 0.0
    %544 = vmatpush1.msra.mxu0 0.0
    %545 = vmatprep.subr.mxu0 0.0
    %546 = vmatpush1.msra.mxu0 0.0
    %547 = vmatprep.subr.mxu0 0.0
    %548 = vmatpush1.msra.mxu0 0.0
    %549 = vmatprep.subr.mxu0 0.0
    %550 = vmatpush1.msra.mxu0 0.0
    %551 = vmatprep.subr.mxu0 0.0
    %552 = vmatpush1.msra.mxu0 0.0
    %553 = vmatprep.subr.mxu0 0.0
    %554 = vmatpush1.msra.mxu0 0.0
    %555 = vmatprep.subr.mxu0 0.0
    %556 = vmatpush1.msra.mxu0 0.0
    %557 = vmatprep.subr.mxu0 0.0
    %558 = vmatpush1.msra.mxu0 0.0
    %559 = vmatprep.subr.mxu0 0.0
    %560 = vmatpush1.msra.mxu0 0.0
    %561 = vmatprep.subr.mxu0 0.0
    %562 = vmatpush1.msra.mxu0 0.0
    %563 = vmatprep.subr.mxu0 0.0
    %564 = vmatpush1.msra.mxu0 0.0
    %565 = vmatprep.subr.mxu0 0.0
    %566 = vmatpush1.msra.mxu0 0.0
    %567 = vmatprep.subr.mxu0 0.0
    %568 = vmatpush1.msra.mxu0 0.0
    %569 = vmatprep.subr.mxu0 0.0
    %570 = vmatpush1.msra.mxu0 0.0
    %571 = vmatprep.subr.mxu0 0.0
    %572 = vmatpush1.msra.mxu0 0.0
    %573 = vmatprep.subr.mxu0 0.0
    %574 = vmatpush1.msra.mxu0 0.0
    %575 = vmatprep.subr.mxu0 0.0
    %576 = vmatpush1.msra.mxu0 0.0
    %577 = vmatprep.subr.mxu0 0.0
    %578 = vmatpush1.msra.mxu0 0.0
    %579 = vmatprep.subr.mxu0 0.0
    %580 = vmatpush1.msra.mxu0 0.0
    %581 = vmatprep.subr.mxu0 0.0
    %582 = vmatpush1.msra.mxu0 0.0
    %583 = vmatprep.subr.mxu0 0.0
    %584 = vmatpush1.msra.mxu0 0.0
    %585 = vmatprep.subr.mxu0 0.0
    %586 = vmatpush1.msra.mxu0 0.0
    %587 = vmatprep.mubr.f32.mxu0 0.0
    %588 = vmatmul.mubr.f32.gmra.mrb[0].mxu0 %v518
    %v589 = vpop.f32.mrb[0].mxu0
    %v590 = vadd.f32 0.0, %v589
    %v591 = vpop.f32.mrb[0].mxu0
    %592 = vmatprep.mubr.f32.mxu0 0.0
    %593 = vmatmul.mubr.f32.gmra.mrb[0].mxu0 %v521
    %v594 = vpop.f32.mrb[0].mxu0
    %v595 = vadd.f32 0.0, %v594
    %v596 = vpop.f32.mrb[0].mxu0
    %597 = vdwg.mxu0
    %598 = vrot.lane.b32.xlu0 %v180, 112
    %v599 = vpop.permute.xlu0 %598
    %600 = vrot.lane.b32.xlu0 %v185, 112
    %v601 = vpop.permute.xlu0 %600
    %602 = vrot.lane.b32.xlu0 %v180, 80
    %v603 = vpop.permute.xlu0 %602
    %604 = vrot.lane.b32.xlu0 %v185, 80
    %v605 = vpop.permute.xlu0 %604
    %v606 = vsel %vm196, %v599, 0
    %v608 = vsel %vm196, %v601, 0
    %v610 = vsel %vm196, %v603, 0
    %v612 = vsel %vm196, %v605, 0
    %614 = vmatprep.subr.mxu0 0.0
    %615 = vmatpush1.xpose.msra.mxu0 %v610
    %616 = vmatprep.subr.mxu0 0.0
    %617 = vmatpush1.xpose.msra.mxu0 %v612
    %618 = vmatprep.subr.mxu0 0.0
    %619 = vmatpush1.xpose.msra.mxu0 0.0
    %620 = vmatprep.subr.mxu0 0.0
    %621 = vmatpush1.xpose.msra.mxu0 0.0
    %622 = vmatprep.subr.mxu0 0.0
    %623 = vmatpush1.xpose.msra.mxu0 0.0
    %624 = vmatprep.subr.mxu0 0.0
    %625 = vmatpush1.xpose.msra.mxu0 0.0
    %626 = vmatprep.subr.mxu0 0.0
    %627 = vmatpush1.xpose.msra.mxu0 0.0
    %628 = vmatprep.subr.mxu0 0.0
    %629 = vmatpush1.xpose.msra.mxu0 0.0
    %630 = vmatprep.subr.mxu0 0.0
    %631 = vmatpush1.xpose.msra.mxu0 0.0
    %632 = vmatprep.subr.mxu0 0.0
    %633 = vmatpush1.xpose.msra.mxu0 0.0
    %634 = vmatprep.subr.mxu0 0.0
    %635 = vmatpush1.xpose.msra.mxu0 0.0
    %636 = vmatprep.subr.mxu0 0.0
    %637 = vmatpush1.xpose.msra.mxu0 0.0
    %638 = vmatprep.subr.mxu0 0.0
    %639 = vmatpush1.xpose.msra.mxu0 0.0
    %640 = vmatprep.subr.mxu0 0.0
    %641 = vmatpush1.xpose.msra.mxu0 0.0
    %642 = vmatprep.subr.mxu0 0.0
    %643 = vmatpush1.xpose.msra.mxu0 0.0
    %644 = vmatprep.subr.mxu0 0.0
    %645 = vmatpush1.xpose.msra.mxu0 0.0
    %646 = vmatprep.subr.mxu0 0.0
    %647 = vmatpush1.xpose.msra.mxu0 0.0
    %648 = vmatprep.subr.mxu0 0.0
    %649 = vmatpush1.xpose.msra.mxu0 0.0
    %650 = vmatprep.subr.mxu0 0.0
    %651 = vmatpush1.xpose.msra.mxu0 0.0
    %652 = vmatprep.subr.mxu0 0.0
    %653 = vmatpush1.xpose.msra.mxu0 0.0
    %654 = vmatprep.subr.mxu0 0.0
    %655 = vmatpush1.xpose.msra.mxu0 0.0
    %656 = vmatprep.subr.mxu0 0.0
    %657 = vmatpush1.xpose.msra.mxu0 0.0
    %658 = vmatprep.subr.mxu0 0.0
    %659 = vmatpush1.xpose.msra.mxu0 0.0
    %660 = vmatprep.subr.mxu0 0.0
    %661 = vmatpush1.xpose.msra.mxu0 0.0
    %662 = vmatprep.subr.mxu0 0.0
    %663 = vmatpush1.xpose.msra.mxu0 0.0
    %664 = vmatprep.subr.mxu0 0.0
    %665 = vmatpush1.xpose.msra.mxu0 0.0
    %666 = vmatprep.subr.mxu0 0.0
    %667 = vmatpush1.xpose.msra.mxu0 0.0
    %668 = vmatprep.subr.mxu0 0.0
    %669 = vmatpush1.xpose.msra.mxu0 0.0
    %670 = vmatprep.subr.mxu0 0.0
    %671 = vmatpush1.xpose.msra.mxu0 0.0
    %672 = vmatprep.subr.mxu0 0.0
    %673 = vmatpush1.xpose.msra.mxu0 0.0
    %674 = vmatprep.subr.mxu0 0.0
    %675 = vmatpush1.xpose.msra.mxu0 0.0
    %676 = vmatprep.subr.mxu0 0.0
    %677 = vmatpush1.xpose.msra.mxu0 0.0
    %678 = vmatprep.mubr.f32.mxu0 0.0
    %679 = vmatmul.mubr.f32.gmra.mrb[0].mxu0 %v606
    %v680 = vpop.f32.mrb[0].mxu0
    %v681 = vadd.f32 0.0, %v680
    %v682 = vpop.f32.mrb[0].mxu0
    %683 = vmatprep.mubr.f32.mxu0 0.0
    %684 = vmatmul.mubr.f32.gmra.mrb[0].mxu0 %v608
    %v685 = vpop.f32.mrb[0].mxu0
    %v686 = vadd.f32 0.0, %v685
    %v687 = vpop.f32.mrb[0].mxu0
    %688 = vdwg.mxu0
    %v689 = vmul.f32 %v681, 0.35355338
    %v690 = vmul.f32 %v686, 0.35355338
    %v691 = vadd.f32 %v689, %v188
    %v692 = vadd.f32 %v690, %v189
    %v693 = vsel %vm284, %v691, -inf
    %694 = vmax.xlane.f32.xlu0 %v693
    %v695 = vpop.xlane.xlu0 %694
    %v696 = vsel %vm284, %v692, -inf
    %697 = vmax.xlane.f32.xlu0 %v696
    %v698 = vpop.xlane.xlu0 %697
    %v699 = vsub.f32 %v691, %v695
    %v700 = vsub.f32 %v692, %v698
    %v701 = vmul.f32 %v699, 1.442695
    %v702 = vpow.pop %v701
    %v703 = vmul.f32 %v700, 1.442695
    %v704 = vpow.pop %v703
    %v705 = vsel %vm284, %v702, 0.0
    %706 = vadd.xlane.f32.xlu0 %v705
    %v707 = vpop.xlane.xlu0 %706
    %v708 = vsel %vm284, %v704, 0.0
    %709 = vadd.xlane.f32.xlu0 %v708
    %v710 = vpop.xlane.xlu0 %709
    %v711 = vrcp.pop %v707
    %v712 = vrcp.pop %v710
    %v713 = vmul.f32 %v702, %v711
    %v714 = vmul.f32 %v704, %v712
    %715 = vrot.lane.b32.xlu0 %v180, 48
    %v716 = vpop.permute.xlu0 %715
    %717 = vrot.lane.b32.xlu0 %v185, 48
    %v718 = vpop.permute.xlu0 %717
    %v722 = vsel %vm284, %v713, 0
    %v725 = vsel %vm284, %v714, 0
    %727 = vmatprep.subr.mxu0 0.0
    %728 = vmatpush1.msra.mxu0 %v716
    %729 = vmatprep.subr.mxu0 0.0
    %730 = vmatpush1.msra.mxu0 %v718
    %731 = vmatprep.subr.mxu0 0.0
    %732 = vmatpush1.msra.mxu0 0.0
    %733 = vmatprep.subr.mxu0 0.0
    %734 = vmatpush1.msra.mxu0 0.0
    %735 = vmatprep.subr.mxu0 0.0
    %736 = vmatpush1.msra.mxu0 0.0
    %737 = vmatprep.subr.mxu0 0.0
    %738 = vmatpush1.msra.mxu0 0.0
    %739 = vmatprep.subr.mxu0 0.0
    %740 = vmatpush1.msra.mxu0 0.0
    %741 = vmatprep.subr.mxu0 0.0
    %742 = vmatpush1.msra.mxu0 0.0
    %743 = vmatprep.subr.mxu0 0.0
    %744 = vmatpush1.msra.mxu0 0.0
    %745 = vmatprep.subr.mxu0 0.0
    %746 = vmatpush1.msra.mxu0 0.0
    %747 = vmatprep.subr.mxu0 0.0
    %748 = vmatpush1.msra.mxu0 0.0
    %749 = vmatprep.subr.mxu0 0.0
    %750 = vmatpush1.msra.mxu0 0.0
    %751 = vmatprep.subr.mxu0 0.0
    %752 = vmatpush1.msra.mxu0 0.0
    %753 = vmatprep.subr.mxu0 0.0
    %754 = vmatpush1.msra.mxu0 0.0
    %755 = vmatprep.subr.mxu0 0.0
    %756 = vmatpush1.msra.mxu0 0.0
    %757 = vmatprep.subr.mxu0 0.0
    %758 = vmatpush1.msra.mxu0 0.0
    %759 = vmatprep.subr.mxu0 0.0
    %760 = vmatpush1.msra.mxu0 0.0
    %761 = vmatprep.subr.mxu0 0.0
    %762 = vmatpush1.msra.mxu0 0.0
    %763 = vmatprep.subr.mxu0 0.0
    %764 = vmatpush1.msra.mxu0 0.0
    %765 = vmatprep.subr.mxu0 0.0
    %766 = vmatpush1.msra.mxu0 0.0
    %767 = vmatprep.subr.mxu0 0.0
    %768 = vmatpush1.msra.mxu0 0.0
    %769 = vmatprep.subr.mxu0 0.0
    %770 = vmatpush1.msra.mxu0 0.0
    %771 = vmatprep.subr.mxu0 0.0
    %772 = vmatpush1.msra.mxu0 0.0
    %773 = vmatprep.subr.mxu0 0.0
    %774 = vmatpush1.msra.mxu0 0.0
    %775 = vmatprep.subr.mxu0 0.0
    %776 = vmatpush1.msra.mxu0 0.0
    %777 = vmatprep.subr.mxu0 0.0
    %778 = vmatpush1.msra.mxu0 0.0
    %779 = vmatprep.subr.mxu0 0.0
    %780 = vmatpush1.msra.mxu0 0.0
    %781 = vmatprep.subr.mxu0 0.0
    %782 = vmatpush1.msra.mxu0 0.0
    %783 = vmatprep.subr.mxu0 0.0
    %784 = vmatpush1.msra.mxu0 0.0
    %785 = vmatprep.subr.mxu0 0.0
    %786 = vmatpush1.msra.mxu0 0.0
    %787 = vmatprep.subr.mxu0 0.0
    %788 = vmatpush1.msra.mxu0 0.0
    %789 = vmatprep.subr.mxu0 0.0
    %790 = vmatpush1.msra.mxu0 0.0
    %791 = vmatprep.mubr.f32.mxu0 0.0
    %792 = vmatmul.mubr.f32.gmra.mrb[0].mxu0 %v722
    %v793 = vpop.f32.mrb[0].mxu0
    %v794 = vadd.f32 0.0, %v793
    %v795 = vpop.f32.mrb[0].mxu0
    %796 = vmatprep.mubr.f32.mxu0 0.0
    %797 = vmatmul.mubr.f32.gmra.mrb[0].mxu0 %v725
    %v798 = vpop.f32.mrb[0].mxu0
    %v799 = vadd.f32 0.0, %v798
    %v800 = vpop.f32.mrb[0].mxu0
    %801 = vdwg.mxu0
    %802 = vrot.lane.b32.xlu0 %v180, 104
    %v803 = vpop.permute.xlu0 %802
    %804 = vrot.lane.b32.xlu0 %v185, 104
    %v805 = vpop.permute.xlu0 %804
    %806 = vrot.lane.b32.xlu0 %v180, 72
    %v807 = vpop.permute.xlu0 %806
    %808 = vrot.lane.b32.xlu0 %v185, 72
    %v809 = vpop.permute.xlu0 %808
    %v810 = vsel %vm196, %v803, 0
    %v812 = vsel %vm196, %v805, 0
    %v814 = vsel %vm196, %v807, 0
    %v816 = vsel %vm196, %v809, 0
    %818 = vmatprep.subr.mxu0 0.0
    %819 = vmatpush1.xpose.msra.mxu0 %v814
    %820 = vmatprep.subr.mxu0 0.0
    %821 = vmatpush1.xpose.msra.mxu0 %v816
    %822 = vmatprep.subr.mxu0 0.0
    %823 = vmatpush1.xpose.msra.mxu0 0.0
    %824 = vmatprep.subr.mxu0 0.0
    %825 = vmatpush1.xpose.msra.mxu0 0.0
    %826 = vmatprep.subr.mxu0 0.0
    %827 = vmatpush1.xpose.msra.mxu0 0.0
    %828 = vmatprep.subr.mxu0 0.0
    %829 = vmatpush1.xpose.msra.mxu0 0.0
    %830 = vmatprep.subr.mxu0 0.0
    %831 = vmatpush1.xpose.msra.mxu0 0.0
    %832 = vmatprep.subr.mxu0 0.0
    %833 = vmatpush1.xpose.msra.mxu0 0.0
    %834 = vmatprep.subr.mxu0 0.0
    %835 = vmatpush1.xpose.msra.mxu0 0.0
    %836 = vmatprep.subr.mxu0 0.0
    %837 = vmatpush1.xpose.msra.mxu0 0.0
    %838 = vmatprep.subr.mxu0 0.0
    %839 = vmatpush1.xpose.msra.mxu0 0.0
    %840 = vmatprep.subr.mxu0 0.0
    %841 = vmatpush1.xpose.msra.mxu0 0.0
    %842 = vmatprep.subr.mxu0 0.0
    %843 = vmatpush1.xpose.msra.mxu0 0.0
    %844 = vmatprep.subr.mxu0 0.0
    %845 = vmatpush1.xpose.msra.mxu0 0.0
    %846 = vmatprep.subr.mxu0 0.0
    %847 = vmatpush1.xpose.msra.mxu0 0.0
    %848 = vmatprep.subr.mxu0 0.0
    %849 = vmatpush1.xpose.msra.mxu0 0.0
    %850 = vmatprep.subr.mxu0 0.0
    %851 = vmatpush1.xpose.msra.mxu0 0.0
    %852 = vmatprep.subr.mxu0 0.0
    %853 = vmatpush1.xpose.msra.mxu0 0.0
    %854 = vmatprep.subr.mxu0 0.0
    %855 = vmatpush1.xpose.msra.mxu0 0.0
    %856 = vmatprep.subr.mxu0 0.0
    %857 = vmatpush1.xpose.msra.mxu0 0.0
    %858 = vmatprep.subr.mxu0 0.0
    %859 = vmatpush1.xpose.msra.mxu0 0.0
    %860 = vmatprep.subr.mxu0 0.0
    %861 = vmatpush1.xpose.msra.mxu0 0.0
    %862 = vmatprep.subr.mxu0 0.0
    %863 = vmatpush1.xpose.msra.mxu0 0.0
    %864 = vmatprep.subr.mxu0 0.0
    %865 = vmatpush1.xpose.msra.mxu0 0.0
    %866 = vmatprep.subr.mxu0 0.0
    %867 = vmatpush1.xpose.msra.mxu0 0.0
    %868 = vmatprep.subr.mxu0 0.0
    %869 = vmatpush1.xpose.msra.mxu0 0.0
    %870 = vmatprep.subr.mxu0 0.0
    %871 = vmatpush1.xpose.msra.mxu0 0.0
    %872 = vmatprep.subr.mxu0 0.0
    %873 = vmatpush1.xpose.msra.mxu0 0.0
    %874 = vmatprep.subr.mxu0 0.0
    %875 = vmatpush1.xpose.msra.mxu0 0.0
    %876 = vmatprep.subr.mxu0 0.0
    %877 = vmatpush1.xpose.msra.mxu0 0.0
    %878 = vmatprep.subr.mxu0 0.0
    %879 = vmatpush1.xpose.msra.mxu0 0.0
    %880 = vmatprep.subr.mxu0 0.0
    %881 = vmatpush1.xpose.msra.mxu0 0.0
    %882 = vmatprep.mubr.f32.mxu0 0.0
    %883 = vmatmul.mubr.f32.gmra.mrb[0].mxu0 %v810
    %v884 = vpop.f32.mrb[0].mxu0
    %v885 = vadd.f32 0.0, %v884
    %v886 = vpop.f32.mrb[0].mxu0
    %887 = vmatprep.mubr.f32.mxu0 0.0
    %888 = vmatmul.mubr.f32.gmra.mrb[0].mxu0 %v812
    %v889 = vpop.f32.mrb[0].mxu0
    %v890 = vadd.f32 0.0, %v889
    %v891 = vpop.f32.mrb[0].mxu0
    %892 = vdwg.mxu0
    %v893 = vmul.f32 %v885, 0.35355338
    %v894 = vmul.f32 %v890, 0.35355338
    %v895 = vadd.f32 %v893, %v188
    %v896 = vadd.f32 %v894, %v189
    %v897 = vsel %vm284, %v895, -inf
    %898 = vmax.xlane.f32.xlu0 %v897
    %v899 = vpop.xlane.xlu0 %898
    %v900 = vsel %vm284, %v896, -inf
    %901 = vmax.xlane.f32.xlu0 %v900
    %v902 = vpop.xlane.xlu0 %901
    %v903 = vsub.f32 %v895, %v899
    %v904 = vsub.f32 %v896, %v902
    %v905 = vmul.f32 %v903, 1.442695
    %v906 = vpow.pop %v905
    %v907 = vmul.f32 %v904, 1.442695
    %v908 = vpow.pop %v907
    %v909 = vsel %vm284, %v906, 0.0
    %910 = vadd.xlane.f32.xlu0 %v909
    %v911 = vpop.xlane.xlu0 %910
    %v912 = vsel %vm284, %v908, 0.0
    %913 = vadd.xlane.f32.xlu0 %v912
    %v914 = vpop.xlane.xlu0 %913
    %v915 = vrcp.pop %v911
    %v916 = vrcp.pop %v914
    %v917 = vmul.f32 %v906, %v915
    %v918 = vmul.f32 %v908, %v916
    %919 = vrot.lane.b32.xlu0 %v180, 40
    %v920 = vpop.permute.xlu0 %919
    %921 = vrot.lane.b32.xlu0 %v185, 40
    %v922 = vpop.permute.xlu0 %921
    %v926 = vsel %vm284, %v917, 0
    %v929 = vsel %vm284, %v918, 0
    %931 = vmatprep.subr.mxu0 0.0
    %932 = vmatpush1.msra.mxu0 %v920
    %933 = vmatprep.subr.mxu0 0.0
    %934 = vmatpush1.msra.mxu0 %v922
    %935 = vmatprep.subr.mxu0 0.0
    %936 = vmatpush1.msra.mxu0 0.0
    %937 = vmatprep.subr.mxu0 0.0
    %938 = vmatpush1.msra.mxu0 0.0
    %939 = vmatprep.subr.mxu0 0.0
    %940 = vmatpush1.msra.mxu0 0.0
    %941 = vmatprep.subr.mxu0 0.0
    %942 = vmatpush1.msra.mxu0 0.0
    %943 = vmatprep.subr.mxu0 0.0
    %944 = vmatpush1.msra.mxu0 0.0
    %945 = vmatprep.subr.mxu0 0.0
    %946 = vmatpush1.msra.mxu0 0.0
    %947 = vmatprep.subr.mxu0 0.0
    %948 = vmatpush1.msra.mxu0 0.0
    %949 = vmatprep.subr.mxu0 0.0
    %950 = vmatpush1.msra.mxu0 0.0
    %951 = vmatprep.subr.mxu0 0.0
    %952 = vmatpush1.msra.mxu0 0.0
    %953 = vmatprep.subr.mxu0 0.0
    %954 = vmatpush1.msra.mxu0 0.0
    %955 = vmatprep.subr.mxu0 0.0
    %956 = vmatpush1.msra.mxu0 0.0
    %957 = vmatprep.subr.mxu0 0.0
    %958 = vmatpush1.msra.mxu0 0.0
    %959 = vmatprep.subr.mxu0 0.0
    %960 = vmatpush1.msra.mxu0 0.0
    %961 = vmatprep.subr.mxu0 0.0
    %962 = vmatpush1.msra.mxu0 0.0
    %963 = vmatprep.subr.mxu0 0.0
    %964 = vmatpush1.msra.mxu0 0.0
    %965 = vmatprep.subr.mxu0 0.0
    %966 = vmatpush1.msra.mxu0 0.0
    %967 = vmatprep.subr.mxu0 0.0
    %968 = vmatpush1.msra.mxu0 0.0
    %969 = vmatprep.subr.mxu0 0.0
    %970 = vmatpush1.msra.mxu0 0.0
    %971 = vmatprep.subr.mxu0 0.0
    %972 = vmatpush1.msra.mxu0 0.0
    %973 = vmatprep.subr.mxu0 0.0
    %974 = vmatpush1.msra.mxu0 0.0
    %975 = vmatprep.subr.mxu0 0.0
    %976 = vmatpush1.msra.mxu0 0.0
    %977 = vmatprep.subr.mxu0 0.0
    %978 = vmatpush1.msra.mxu0 0.0
    %979 = vmatprep.subr.mxu0 0.0
    %980 = vmatpush1.msra.mxu0 0.0
    %981 = vmatprep.subr.mxu0 0.0
    %982 = vmatpush1.msra.mxu0 0.0
    %983 = vmatprep.subr.mxu0 0.0
    %984 = vmatpush1.msra.mxu0 0.0
    %985 = vmatprep.subr.mxu0 0.0
    %986 = vmatpush1.msra.mxu0 0.0
    %987 = vmatprep.subr.mxu0 0.0
    %988 = vmatpush1.msra.mxu0 0.0
    %989 = vmatprep.subr.mxu0 0.0
    %990 = vmatpush1.msra.mxu0 0.0
    %991 = vmatprep.subr.mxu0 0.0
    %992 = vmatpush1.msra.mxu0 0.0
    %993 = vmatprep.subr.mxu0 0.0
    %994 = vmatpush1.msra.mxu0 0.0
    %995 = vmatprep.mubr.f32.mxu0 0.0
    %996 = vmatmul.mubr.f32.gmra.mrb[0].mxu0 %v926
    %v997 = vpop.f32.mrb[0].mxu0
    %v998 = vadd.f32 0.0, %v997
    %v999 = vpop.f32.mrb[0].mxu0
    %1000 = vmatprep.mubr.f32.mxu0 0.0
    %1001 = vmatmul.mubr.f32.gmra.mrb[0].mxu0 %v929
    %v1002 = vpop.f32.mrb[0].mxu0
    %v1003 = vadd.f32 0.0, %v1002
    %v1004 = vpop.f32.mrb[0].mxu0
    %1005 = vdwg.mxu0
    %1008 = vrot.lane.b32.xlu0 %v590, 8
    %v1009 = vpop.permute.xlu0 %1008
    %1010 = vrot.lane.b32.xlu0 %v595, 8
    %v1011 = vpop.permute.xlu0 %1010
    %1016 = vrot.lane.b32.xlu0 %v794, 16
    %v1017 = vpop.permute.xlu0 %1016
    %1018 = vrot.lane.b32.xlu0 %v799, 16
    %v1019 = vpop.permute.xlu0 %1018
    %1024 = vrot.lane.b32.xlu0 %v998, 24
    %v1025 = vpop.permute.xlu0 %1024
    %1026 = vrot.lane.b32.xlu0 %v1003, 24
    %v1027 = vpop.permute.xlu0 %1026
    %v1030 = vsel %vm196, %v386, %v1009
    %v1031 = vsel %vm196, %v391, %v1011
    %v1032 = vsel %vm284, %v1030, %v1017
    %v1033 = vsel %vm284, %v1031, %v1019
    %vm1034 = vcmask 195584
    %v1035 = vsel %vm1034, %v1032, %v1025
    %v1036 = vsel %vm1034, %v1033, %v1027
    %v1037 = vld [vmem:[%s6] sm:$0xff]
    %v1038 = vld [vmem:[%s6 + $0x8] sm:$0xff]
    %v1039 = vld [vmem:[%s6 + $0x10] sm:$0xff]
    %v1040 = vld [vmem:[%s6 + $0x18] sm:$0xff]
    %v1041 = vld [vmem:[%s7] sm:$0x1]
    %v1043 = vlaneseq
    %v1044 = vshrl.u32 %v1043, 7
    %v1045 = vsub.s32 0, %v1044
    %v1046 = vrot.slane %v1041, %v1045
    %v1049 = vsel %vm52, %v1035, 0
    %v1052 = vsel %vm52, %v1036, 0
    %1054 = vmatprep.subr.mxu0 0.0
    %1055 = vmatpush1.msra.mxu0 %v1037
    %1056 = vmatprep.subr.mxu0 0.0
    %1057 = vmatpush1.msra.mxu0 %v1038
    %1058 = vmatprep.subr.mxu0 0.0
    %1059 = vmatpush1.msra.mxu0 %v1039
    %1060 = vmatprep.subr.mxu0 0.0
    %1061 = vmatpush1.msra.mxu0 %v1040
    %1062 = vmatprep.subr.mxu0 0.0
    %1063 = vmatpush1.msra.mxu0 0.0
    %1064 = vmatprep.subr.mxu0 0.0
    %1065 = vmatpush1.msra.mxu0 0.0
    %1066 = vmatprep.subr.mxu0 0.0
    %1067 = vmatpush1.msra.mxu0 0.0
    %1068 = vmatprep.subr.mxu0 0.0
    %1069 = vmatpush1.msra.mxu0 0.0
    %1070 = vmatprep.subr.mxu0 0.0
    %1071 = vmatpush1.msra.mxu0 0.0
    %1072 = vmatprep.subr.mxu0 0.0
    %1073 = vmatpush1.msra.mxu0 0.0
    %1074 = vmatprep.subr.mxu0 0.0
    %1075 = vmatpush1.msra.mxu0 0.0
    %1076 = vmatprep.subr.mxu0 0.0
    %1077 = vmatpush1.msra.mxu0 0.0
    %1078 = vmatprep.subr.mxu0 0.0
    %1079 = vmatpush1.msra.mxu0 0.0
    %1080 = vmatprep.subr.mxu0 0.0
    %1081 = vmatpush1.msra.mxu0 0.0
    %1082 = vmatprep.subr.mxu0 0.0
    %1083 = vmatpush1.msra.mxu0 0.0
    %1084 = vmatprep.subr.mxu0 0.0
    %1085 = vmatpush1.msra.mxu0 0.0
    %1086 = vmatprep.subr.mxu0 0.0
    %1087 = vmatpush1.msra.mxu0 0.0
    %1088 = vmatprep.subr.mxu0 0.0
    %1089 = vmatpush1.msra.mxu0 0.0
    %1090 = vmatprep.subr.mxu0 0.0
    %1091 = vmatpush1.msra.mxu0 0.0
    %1092 = vmatprep.subr.mxu0 0.0
    %1093 = vmatpush1.msra.mxu0 0.0
    %1094 = vmatprep.subr.mxu0 0.0
    %1095 = vmatpush1.msra.mxu0 0.0
    %1096 = vmatprep.subr.mxu0 0.0
    %1097 = vmatpush1.msra.mxu0 0.0
    %1098 = vmatprep.subr.mxu0 0.0
    %1099 = vmatpush1.msra.mxu0 0.0
    %1100 = vmatprep.subr.mxu0 0.0
    %1101 = vmatpush1.msra.mxu0 0.0
    %1102 = vmatprep.subr.mxu0 0.0
    %1103 = vmatpush1.msra.mxu0 0.0
    %1104 = vmatprep.subr.mxu0 0.0
    %1105 = vmatpush1.msra.mxu0 0.0
    %1106 = vmatprep.subr.mxu0 0.0
    %1107 = vmatpush1.msra.mxu0 0.0
    %1108 = vmatprep.subr.mxu0 0.0
    %1109 = vmatpush1.msra.mxu0 0.0
    %1110 = vmatprep.subr.mxu0 0.0
    %1111 = vmatpush1.msra.mxu0 0.0
    %1112 = vmatprep.subr.mxu0 0.0
    %1113 = vmatpush1.msra.mxu0 0.0
    %1114 = vmatprep.subr.mxu0 0.0
    %1115 = vmatpush1.msra.mxu0 0.0
    %1116 = vmatprep.subr.mxu0 0.0
    %1117 = vmatpush1.msra.mxu0 0.0
    %1118 = vmatprep.mubr.f32.mxu0 0.0
    %1119 = vmatmul.mubr.f32.gmra.mrb[0].mxu0 %v1049
    %v1120 = vpop.f32.mrb[0].mxu0
    %v1121 = vadd.f32 %v1046, %v1120
    %v1122 = vpop.f32.mrb[0].mxu0
    %1123 = vmatprep.mubr.f32.mxu0 0.0
    %1124 = vmatmul.mubr.f32.gmra.mrb[0].mxu0 %v1052
    %v1125 = vpop.f32.mrb[0].mxu0
    %v1126 = vadd.f32 %v1046, %v1125
    %v1127 = vpop.f32.mrb[0].mxu0
    %1128 = vdwg.mxu0
    %v1129 = vadd.f32 %v48, %v1121
    %v1130 = vadd.f32 %v49, %v1126
    %v1131 = vld [vmem:[%s8] sm:$0x1]
    %v1132 = vld [vmem:[%s9] sm:$0x1]
    %v1133 = vsel %vm52, %v1129, 0.0
    %1134 = vadd.xlane.f32.xlu0 %v1133
    %v1135 = vpop.xlane.xlu0 %1134
    %v1136 = vsel %vm52, %v1130, 0.0
    %1137 = vadd.xlane.f32.xlu0 %v1136
    %v1138 = vpop.xlane.xlu0 %1137
    %v1139 = vmul.f32 %v1135, %v59
    %v1140 = vmul.f32 %v1138, %v59
    %v1141 = vsub.f32 %v1129, %v1139
    %v1142 = vsub.f32 %v1130, %v1140
    %v1143 = vmul.f32 %v1141, %v1141
    %v1144 = vmul.f32 %v1142, %v1142
    %v1145 = vsel %vm52, %v1143, 0.0
    %1146 = vadd.xlane.f32.xlu0 %v1145
    %v1147 = vpop.xlane.xlu0 %1146
    %v1148 = vsel %vm52, %v1144, 0.0
    %1149 = vadd.xlane.f32.xlu0 %v1148
    %v1150 = vpop.xlane.xlu0 %1149
    %v1151 = vmul.f32 %v1147, %v59
    %v1152 = vmul.f32 %v1150, %v59
    %v1153 = vadd.f32 %v1151, 1e-05
    %v1154 = vadd.f32 %v1152, 1e-05
    %v1155 = vrsqrt.pop %v1153
    %v1156 = vrsqrt.pop %v1154
    %v1157 = vmul.f32 %v1141, %v1155
    %v1158 = vmul.f32 %v1142, %v1156
    %v1160 = vlaneseq
    %v1161 = vshrl.u32 %v1160, 7
    %v1162 = vsub.s32 0, %v1161
    %v1163 = vrot.slane %v1131, %v1162
    %v1165 = vmul.f32 %v1157, %v1163
    %v1166 = vmul.f32 %v1158, %v1163
    %v1168 = vlaneseq
    %v1169 = vshrl.u32 %v1168, 7
    %v1170 = vsub.s32 0, %v1169
    %v1171 = vrot.slane %v1132, %v1170
    %v1173 = vadd.f32 %v1165, %v1171
    %v1174 = vadd.f32 %v1166, %v1171
    %v1175 = vld [vmem:[%s10] sm:$0xff]
    %v1176 = vld [vmem:[%s10 + $0x8] sm:$0xff]
    %v1177 = vld [vmem:[%s10 + $0x10] sm:$0xff]
    %v1178 = vld [vmem:[%s10 + $0x18] sm:$0xff]
    %v1179 = vld [vmem:[%s11] sm:$0x1]
    %v1181 = vlaneseq
    %v1182 = vshrl.u32 %v1181, 7
    %v1183 = vsub.s32 0, %v1182
    %v1184 = vrot.slane %v1179, %v1183
    %v1187 = vsel %vm52, %v1173, 0
    %v1190 = vsel %vm52, %v1174, 0
    %1192 = vmatprep.subr.mxu0 0.0
    %1193 = vmatpush1.msra.mxu0 %v1175
    %1194 = vmatprep.subr.mxu0 0.0
    %1195 = vmatpush1.msra.mxu0 %v1176
    %1196 = vmatprep.subr.mxu0 0.0
    %1197 = vmatpush1.msra.mxu0 %v1177
    %1198 = vmatprep.subr.mxu0 0.0
    %1199 = vmatpush1.msra.mxu0 %v1178
    %1200 = vmatprep.subr.mxu0 0.0
    %1201 = vmatpush1.msra.mxu0 0.0
    %1202 = vmatprep.subr.mxu0 0.0
    %1203 = vmatpush1.msra.mxu0 0.0
    %1204 = vmatprep.subr.mxu0 0.0
    %1205 = vmatpush1.msra.mxu0 0.0
    %1206 = vmatprep.subr.mxu0 0.0
    %1207 = vmatpush1.msra.mxu0 0.0
    %1208 = vmatprep.subr.mxu0 0.0
    %1209 = vmatpush1.msra.mxu0 0.0
    %1210 = vmatprep.subr.mxu0 0.0
    %1211 = vmatpush1.msra.mxu0 0.0
    %1212 = vmatprep.subr.mxu0 0.0
    %1213 = vmatpush1.msra.mxu0 0.0
    %1214 = vmatprep.subr.mxu0 0.0
    %1215 = vmatpush1.msra.mxu0 0.0
    %1216 = vmatprep.subr.mxu0 0.0
    %1217 = vmatpush1.msra.mxu0 0.0
    %1218 = vmatprep.subr.mxu0 0.0
    %1219 = vmatpush1.msra.mxu0 0.0
    %1220 = vmatprep.subr.mxu0 0.0
    %1221 = vmatpush1.msra.mxu0 0.0
    %1222 = vmatprep.subr.mxu0 0.0
    %1223 = vmatpush1.msra.mxu0 0.0
    %1224 = vmatprep.subr.mxu0 0.0
    %1225 = vmatpush1.msra.mxu0 0.0
    %1226 = vmatprep.subr.mxu0 0.0
    %1227 = vmatpush1.msra.mxu0 0.0
    %1228 = vmatprep.subr.mxu0 0.0
    %1229 = vmatpush1.msra.mxu0 0.0
    %1230 = vmatprep.subr.mxu0 0.0
    %1231 = vmatpush1.msra.mxu0 0.0
    %1232 = vmatprep.subr.mxu0 0.0
    %1233 = vmatpush1.msra.mxu0 0.0
    %1234 = vmatprep.subr.mxu0 0.0
    %1235 = vmatpush1.msra.mxu0 0.0
    %1236 = vmatprep.subr.mxu0 0.0
    %1237 = vmatpush1.msra.mxu0 0.0
    %1238 = vmatprep.subr.mxu0 0.0
    %1239 = vmatpush1.msra.mxu0 0.0
    %1240 = vmatprep.subr.mxu0 0.0
    %1241 = vmatpush1.msra.mxu0 0.0
    %1242 = vmatprep.subr.mxu0 0.0
    %1243 = vmatpush1.msra.mxu0 0.0
    %1244 = vmatprep.subr.mxu0 0.0
    %1245 = vmatpush1.msra.mxu0 0.0
    %1246 = vmatprep.subr.mxu0 0.0
    %1247 = vmatpush1.msra.mxu0 0.0
    %1248 = vmatprep.subr.mxu0 0.0
    %1249 = vmatpush1.msra.mxu0 0.0
    %1250 = vmatprep.subr.mxu0 0.0
    %1251 = vmatpush1.msra.mxu0 0.0
    %1252 = vmatprep.subr.mxu0 0.0
    %1253 = vmatpush1.msra.mxu0 0.0
    %1254 = vmatprep.subr.mxu0 0.0
    %1255 = vmatpush1.msra.mxu0 0.0
    %1256 = vmatprep.mubr.f32.mxu0 0.0
    %1257 = vmatmul.mubr.f32.gmra.mrb[0].mxu0 %v1187
    %v1258 = vpop.f32.mrb[0].mxu0
    %v1259 = vadd.f32 %v1184, %v1258
    %v1260 = vpop.f32.mrb[0].mxu0
    %1261 = vmatprep.mubr.f32.mxu0 0.0
    %1262 = vmatmul.mubr.f32.gmra.mrb[0].mxu0 %v1190
    %v1263 = vpop.f32.mrb[0].mxu0
    %v1264 = vadd.f32 %v1184, %v1263
    %v1265 = vpop.f32.mrb[0].mxu0
    %1266 = vdwg.mxu0
    %v1267 = vxor.u32 %v1259, 2147483648
    %v1268 = vxor.u32 %v1264, 2147483648
    %v1269 = vmul.f32 %v1267, 1.442695
    %v1270 = vpow.pop %v1269
    %v1271 = vmul.f32 %v1268, 1.442695
    %v1272 = vpow.pop %v1271
    %v1273 = vadd.f32 %v1270, 1.0
    %v1274 = vadd.f32 %v1272, 1.0
    %v1275 = vrcp.pop %v1273
    %v1276 = vmul.f32 1.0, %v1275
    %v1277 = vrcp.pop %v1274
    %v1278 = vmul.f32 1.0, %v1277
    %v1279 = vmul.f32 %v1259, %v1276
    %v1280 = vmul.f32 %v1264, %v1278
    %v1281 = vld [vmem:[%s12] sm:$0xff]
    %v1282 = vld [vmem:[%s12 + $0x8] sm:$0xff]
    %v1283 = vld [vmem:[%s12 + $0x10] sm:$0xff]
    %v1284 = vld [vmem:[%s12 + $0x18] sm:$0xff]
    %v1285 = vld [vmem:[%s12 + $0x20] sm:$0xff]
    %v1286 = vld [vmem:[%s12 + $0x28] sm:$0xff]
    %v1287 = vld [vmem:[%s12 + $0x30] sm:$0xff]
    %v1288 = vld [vmem:[%s12 + $0x38] sm:$0xff]
    %v1289 = vld [vmem:[%s12 + $0x40] sm:$0xff]
    %v1290 = vld [vmem:[%s12 + $0x48] sm:$0xff]
    %v1291 = vld [vmem:[%s12 + $0x50] sm:$0xff]
    %v1292 = vld [vmem:[%s12 + $0x58] sm:$0xff]
    %v1293 = vld [vmem:[%s12 + $0x60] sm:$0xff]
    %v1294 = vld [vmem:[%s12 + $0x68] sm:$0xff]
    %v1295 = vld [vmem:[%s12 + $0x70] sm:$0xff]
    %v1296 = vld [vmem:[%s12 + $0x78] sm:$0xff]
    %v1297 = vld [vmem:[%s13] sm:$0x1]
    %v1299 = vlaneseq
    %v1300 = vshrl.u32 %v1299, 7
    %v1301 = vsub.s32 0, %v1300
    %v1302 = vrot.slane %v1297, %v1301
    %1304 = vmatprep.subr.mxu0 0.0
    %1305 = vmatpush1.msra.mxu0 %v1281
    %1306 = vmatprep.subr.mxu0 0.0
    %1307 = vmatpush1.msra.mxu0 %v1282
    %1308 = vmatprep.subr.mxu0 0.0
    %1309 = vmatpush1.msra.mxu0 %v1283
    %1310 = vmatprep.subr.mxu0 0.0
    %1311 = vmatpush1.msra.mxu0 %v1284
    %1312 = vmatprep.subr.mxu0 0.0
    %1313 = vmatpush1.msra.mxu0 %v1285
    %1314 = vmatprep.subr.mxu0 0.0
    %1315 = vmatpush1.msra.mxu0 %v1286
    %1316 = vmatprep.subr.mxu0 0.0
    %1317 = vmatpush1.msra.mxu0 %v1287
    %1318 = vmatprep.subr.mxu0 0.0
    %1319 = vmatpush1.msra.mxu0 %v1288
    %1320 = vmatprep.subr.mxu0 0.0
    %1321 = vmatpush1.msra.mxu0 %v1289
    %1322 = vmatprep.subr.mxu0 0.0
    %1323 = vmatpush1.msra.mxu0 %v1290
    %1324 = vmatprep.subr.mxu0 0.0
    %1325 = vmatpush1.msra.mxu0 %v1291
    %1326 = vmatprep.subr.mxu0 0.0
    %1327 = vmatpush1.msra.mxu0 %v1292
    %1328 = vmatprep.subr.mxu0 0.0
    %1329 = vmatpush1.msra.mxu0 %v1293
    %1330 = vmatprep.subr.mxu0 0.0
    %1331 = vmatpush1.msra.mxu0 %v1294
    %1332 = vmatprep.subr.mxu0 0.0
    %1333 = vmatpush1.msra.mxu0 %v1295
    %1334 = vmatprep.subr.mxu0 0.0
    %1335 = vmatpush1.msra.mxu0 %v1296
    %1336 = vmatprep.subr.mxu0 0.0
    %1337 = vmatpush1.msra.mxu0 0.0
    %1338 = vmatprep.subr.mxu0 0.0
    %1339 = vmatpush1.msra.mxu0 0.0
    %1340 = vmatprep.subr.mxu0 0.0
    %1341 = vmatpush1.msra.mxu0 0.0
    %1342 = vmatprep.subr.mxu0 0.0
    %1343 = vmatpush1.msra.mxu0 0.0
    %1344 = vmatprep.subr.mxu0 0.0
    %1345 = vmatpush1.msra.mxu0 0.0
    %1346 = vmatprep.subr.mxu0 0.0
    %1347 = vmatpush1.msra.mxu0 0.0
    %1348 = vmatprep.subr.mxu0 0.0
    %1349 = vmatpush1.msra.mxu0 0.0
    %1350 = vmatprep.subr.mxu0 0.0
    %1351 = vmatpush1.msra.mxu0 0.0
    %1352 = vmatprep.subr.mxu0 0.0
    %1353 = vmatpush1.msra.mxu0 0.0
    %1354 = vmatprep.subr.mxu0 0.0
    %1355 = vmatpush1.msra.mxu0 0.0
    %1356 = vmatprep.subr.mxu0 0.0
    %1357 = vmatpush1.msra.mxu0 0.0
    %1358 = vmatprep.subr.mxu0 0.0
    %1359 = vmatpush1.msra.mxu0 0.0
    %1360 = vmatprep.subr.mxu0 0.0
    %1361 = vmatpush1.msra.mxu0 0.0
    %1362 = vmatprep.subr.mxu0 0.0
    %1363 = vmatpush1.msra.mxu0 0.0
    %1364 = vmatprep.subr.mxu0 0.0
    %1365 = vmatpush1.msra.mxu0 0.0
    %1366 = vmatprep.subr.mxu0 0.0
    %1367 = vmatpush1.msra.mxu0 0.0
    %1368 = vmatprep.mubr.f32.mxu0 0.0
    %1369 = vmatmul.mubr.f32.gmra.mrb[0].mxu0 %v1279
    %v1370 = vpop.f32.mrb[0].mxu0
    %v1371 = vadd.f32 %v1302, %v1370
    %v1372 = vpop.f32.mrb[0].mxu0
    %1373 = vmatprep.mubr.f32.mxu0 0.0
    %1374 = vmatmul.mubr.f32.gmra.mrb[0].mxu0 %v1280
    %v1375 = vpop.f32.mrb[0].mxu0
    %v1376 = vadd.f32 %v1302, %v1375
    %v1377 = vpop.f32.mrb[0].mxu0
    %1378 = vdwg.mxu0
    %v1379 = vadd.f32 %v1129, %v1371
    %v1380 = vadd.f32 %v1130, %v1376
    %1381 = vst.msk [vmem:[#allocation2] sm:$0xff] %vm52, %v1379
    %1382 = vst.msk [vmem:[#allocation2 + $0x8] sm:$0xff] %vm52, %v1380
    // Predicated region
    $region58: #{tpu_custom_call.1} parent=1 // pred_check
      _
    $region59: #{tpu_custom_call.1} parent=1 // pred_check_branch
      %1384 = sbr.rel (0) target = $region61
    $region60: #{tpu_custom_call.1} parent=1 // pred_region
      %s1386 = ssub.s32 256, 256
      %1387 = vsyncadd [#allocation3], %s1386
      %s1388 = sshll.u32 [#allocation2], 4
      %s1389 = int_to_ptr.vmem [resolvable:$true] %s1388
      %1394 = dma.vmem_to_hbm [thread:$0]  %s1389, 256, %s14, [#allocation3], 128, 128, 8
    $region61: #{tpu_custom_call.1} parent=1 // pred_fallthru
      _
    // Predicated region
    $region62: #{tpu_custom_call.1} parent=1 // pred_check
      _
    $region63: #{tpu_custom_call.1} parent=1 // pred_check_branch
      %1396 = sbr.rel (0) target = $region65
    $region64: #{tpu_custom_call.1} parent=1 // pred_region
      %1397 = dma.done [#allocation3], 256
    $region65: #{tpu_custom_call.1} parent=1 // pred_fallthru
      _
    %1398 = vsyncpa [#allocation3], 1

</llo_original>
